<compile_context>
chip_gen: v6e
topology: v6e:2x2x1
jax: 0.10.0
libtpu: 0.0.40
codegen_flags: <defaults>
</compile_context>

<pallas_src>
import functools

import jax
import jax.numpy as jnp
from jax.experimental import pallas as pl
from jax.experimental.pallas import tpu as pltpu


def _round_up(n, m):
    return ((n + m - 1) // m) * m


def _layernorm_relu(y, g32, beta32, eps=1e-5):
    # y is already f32 (matmul accumulated in f32). Biased variance, matching
    # torch.nn.LayerNorm.
    mean = jnp.mean(y, axis=-1, keepdims=True)
    var = jnp.mean(jnp.square(y - mean), axis=-1, keepdims=True)
    y = (y - mean) * jax.lax.rsqrt(var + eps)
    return jnp.maximum(y * g32 + beta32, 0.0)


def mlp_kernel(x_ref, w1_ref, b1_ref, w2_ref, b2_ref, w3_ref, b3_ref,
               g_ref, beta_ref, o_ref, *, num_hidden_layers):
    # Hoist the small per-feature f32 casts out of the repeated hidden block:
    # they are emitted exactly once per grid step.
    g32 = g_ref[...].astype(jnp.float32)
    beta32 = beta_ref[...].astype(jnp.float32)
    b1_32 = b1_ref[...].astype(jnp.float32)
    b2_32 = b2_ref[...].astype(jnp.float32)
    b3_32 = b3_ref[...].astype(jnp.float32)

    act_dtype = x_ref.dtype          # keep inter-layer activations narrow
    x = x_ref[...]                   # native dtype straight to the MXU
    w2 = w2_ref[...]                 # loaded once, reused every iteration

    def block(h, w, b32):
        # Linear (f32 accumulation on the MXU) -> LayerNorm -> ReLU.
        y = jnp.dot(h, w, preferred_element_type=jnp.float32) + b32
        y = _layernorm_relu(y, g32, beta32)
        return y.astype(act_dtype)

    h = block(x, w1_ref[...], b1_32)

    if num_hidden_layers > 0:
        h = jax.lax.fori_loop(
            0, num_hidden_layers,
            lambda _, hc: block(hc, w2, b2_32),
            h,
            unroll=(num_hidden_layers <= 8))

    out = jnp.dot(h, w3_ref[...], preferred_element_type=jnp.float32) + b3_32
    o_ref[...] = out.astype(o_ref.dtype)


def mlp_forward(x, params, *, num_hidden_layers, batch_tile=None,
                vmem_limit_bytes=None):
    w1, b1, w2, b2, w3, b3, gamma, beta = params
    B, in_dim = x.shape
    hid = w1.shape[1]
    out_dim = w3.shape[1]

    # --- MXU-friendly batch tile: as large as reasonable, multiple of 8. ----
    if batch_tile is None:
        batch_tile = min(512, _round_up(B, 8))
    batch_tile = _round_up(batch_tile, 8)
    Bp = _round_up(B, batch_tile)
    if Bp != B:
        x = jnp.pad(x, ((0, Bp - B), (0, 0)))

    # --- Lane-dense output: pad out features to a multiple of 128. ----------
    out_p = _round_up(out_dim, 128)
    if out_p != out_dim:
        w3 = jnp.pad(w3, ((0, 0), (0, out_p - out_dim)))
        b3 = jnp.pad(b3, ((0, 0), (0, out_p - out_dim)))

    grid = (Bp // batch_tile,)
    kernel = functools.partial(mlp_kernel, num_hidden_layers=num_hidden_layers)

    def build(single_buffer_consts):
        def const(shape):
            idx = lambda i: tuple(0 for _ in shape)
            if single_buffer_consts:
                # grid-invariant operand: never refetched -> 1 buffer halves
                # its VMEM footprint (headroom for bigger batch tiles / v7x).
                return pl.BlockSpec(shape, idx, pipeline_mode=pl.Buffered(1))
            return pl.BlockSpec(shape, idx)

        return pl.pallas_call(
            kernel,
            out_shape=jax.ShapeDtypeStruct((Bp, out_p), x.dtype),
            grid_spec=pltpu.PrefetchScalarGridSpec(
                num_scalar_prefetch=0,
                grid=grid,
                in_specs=[
                    pl.BlockSpec((batch_tile, in_dim), lambda i: (i, 0)),  # x
                    const((in_dim, hid)),   # w1
                    const((1, hid)),        # b1
                    const((hid, hid)),      # w2
                    const((1, hid)),        # b2
                    const((hid, out_p)),    # w3 (lane-padded)
                    const((1, out_p)),      # b3 (lane-padded)
                    const((1, hid)),        # layernorm gamma
                    const((1, hid)),        # layernorm beta
                ],
                out_specs=pl.BlockSpec((batch_tile, out_p), lambda i: (i, 0)),
            ),
            compiler_params=pltpu.CompilerParams(
                dimension_semantics=("parallel",),
                vmem_limit_bytes=vmem_limit_bytes),
        )

    args = (x, w1, b1, w2, b2, w3, b3, gamma, beta)
    try:
        out = build(True)(*args)
    except Exception:
        # pl.Buffered(1) rejected by this jax build -> fall back to default
        # double buffering (correctness over the VMEM micro-opt).
        out = build(False)(*args)

    return out[:B, :out_dim]


def init_params(key, input_dim, hidden_dim, output_dim, dtype=jnp.float32):
    # Deterministic init mimicking nn.Linear defaults (uniform +/- 1/sqrt(fan_in)).
    ks = jax.random.split(key, 6)

    def linear(kw, kb, fan_in, fan_out):
        bound = 1.0 / jnp.sqrt(fan_in)
        w = jax.random.uniform(kw, (fan_in, fan_out), dtype, -bound, bound)
        b = jax.random.uniform(kb, (1, fan_out), dtype, -bound, bound)
        return w, b

    w1, b1 = linear(ks[0], ks[1], input_dim, hidden_dim)
    w2, b2 = linear(ks[2], ks[3], hidden_dim, hidden_dim)
    w3, b3 = linear(ks[4], ks[5], hidden_dim, output_dim)
    gamma = jnp.ones((1, hidden_dim), dtype)
    beta = jnp.zeros((1, hidden_dim), dtype)
    return (w1, b1, w2, b2, w3, b3, gamma, beta)


def mlp_reference(x, params, num_hidden_layers, eps=1e-5):
    w1, b1, w2, b2, w3, b3, gamma, beta = params

    def ln(h):
        m = jnp.mean(h, -1, keepdims=True)
        v = jnp.mean(jnp.square(h - m), -1, keepdims=True)
        return (h - m) / jnp.sqrt(v + eps) * gamma + beta

    h = jnp.maximum(ln(x @ w1 + b1), 0.0)
    for _ in range(num_hidden_layers):
        h = jnp.maximum(ln(h @ w2 + b2), 0.0)
    return h @ w3 + b3


if __name__ == "__main__":
    input_dim, hidden_dim, output_dim, hidden_layer = 16, 32, 8, 2
    batch = 16

    key = jax.random.PRNGKey(0)
    kx, kp = jax.random.split(key)
    x = jax.random.normal(kx, (batch, input_dim), jnp.float32)
    params = init_params(kp, input_dim, hidden_dim, output_dim)

    out = mlp_forward(x, params, num_hidden_layers=hidden_layer)
    out = jax.block_until_ready(out)

    ref = mlp_reference(x, params, hidden_layer)
    assert out.shape == (batch, output_dim)
    assert jnp.allclose(out, ref, atol=1e-4, rtol=1e-4), "mismatch vs reference"

    print("KERNEL_OK")
</pallas_src>

<mosaic_0001>
module attributes {stable_mosaic.version = 11 : i64} {
  func.func @mlp_kernel(%arg0: i32, %arg1: memref<16x16xf32, #tpu.memory_space<vmem>>, %arg2: memref<16x32xf32, #tpu.memory_space<vmem>>, %arg3: memref<1x32xf32, #tpu.memory_space<vmem>>, %arg4: memref<32x32xf32, #tpu.memory_space<vmem>>, %arg5: memref<1x32xf32, #tpu.memory_space<vmem>>, %arg6: memref<32x128xf32, #tpu.memory_space<vmem>>, %arg7: memref<1x128xf32, #tpu.memory_space<vmem>>, %arg8: memref<1x32xf32, #tpu.memory_space<vmem>>, %arg9: memref<1x32xf32, #tpu.memory_space<vmem>>, %arg10: memref<16x128xf32, #tpu.memory_space<vmem>>) attributes {dimension_semantics = [#tpu.dimension_semantics<parallel>], iteration_bounds = array<i64: 1>, scalar_prefetch = 0 : i64, scratch_operands = 0 : i64, tpu.core_type = #tpu.core_type<tc>, window_params = [{transform_indices = @transform_0, window_bounds = array<i64: 16, 16>}, {pipeline_mode = #tpu.pipeline_mode<synchronous>, transform_indices = @transform_1, window_bounds = array<i64: 16, 32>}, {pipeline_mode = #tpu.pipeline_mode<synchronous>, transform_indices = @transform_2, window_bounds = array<i64: 1, 32>}, {pipeline_mode = #tpu.pipeline_mode<synchronous>, transform_indices = @transform_3, window_bounds = array<i64: 32, 32>}, {pipeline_mode = #tpu.pipeline_mode<synchronous>, transform_indices = @transform_4, window_bounds = array<i64: 1, 32>}, {pipeline_mode = #tpu.pipeline_mode<synchronous>, transform_indices = @transform_5, window_bounds = array<i64: 32, 128>}, {pipeline_mode = #tpu.pipeline_mode<synchronous>, transform_indices = @transform_6, window_bounds = array<i64: 1, 128>}, {pipeline_mode = #tpu.pipeline_mode<synchronous>, transform_indices = @transform_7, window_bounds = array<i64: 1, 32>}, {pipeline_mode = #tpu.pipeline_mode<synchronous>, transform_indices = @transform_8, window_bounds = array<i64: 1, 32>}, {transform_indices = @transform_9, window_bounds = array<i64: 16, 128>}]} {
    %c0 = arith.constant 0 : index
    %c0_0 = arith.constant 0 : index
    %0 = vector.load %arg8[%c0, %c0_0] : memref<1x32xf32, #tpu.memory_space<vmem>>, vector<1x32xf32>
    %c0_1 = arith.constant 0 : index
    %c0_2 = arith.constant 0 : index
    %1 = vector.load %arg9[%c0_1, %c0_2] : memref<1x32xf32, #tpu.memory_space<vmem>>, vector<1x32xf32>
    %c0_3 = arith.constant 0 : index
    %c0_4 = arith.constant 0 : index
    %2 = vector.load %arg3[%c0_3, %c0_4] : memref<1x32xf32, #tpu.memory_space<vmem>>, vector<1x32xf32>
    %c0_5 = arith.constant 0 : index
    %c0_6 = arith.constant 0 : index
    %3 = vector.load %arg5[%c0_5, %c0_6] : memref<1x32xf32, #tpu.memory_space<vmem>>, vector<1x32xf32>
    %c0_7 = arith.constant 0 : index
    %c0_8 = arith.constant 0 : index
    %4 = vector.load %arg7[%c0_7, %c0_8] : memref<1x128xf32, #tpu.memory_space<vmem>>, vector<1x128xf32>
    %c0_9 = arith.constant 0 : index
    %c0_10 = arith.constant 0 : index
    %5 = vector.load %arg1[%c0_9, %c0_10] : memref<16x16xf32, #tpu.memory_space<vmem>>, vector<16x16xf32>
    %c0_11 = arith.constant 0 : index
    %c0_12 = arith.constant 0 : index
    %6 = vector.load %arg4[%c0_11, %c0_12] : memref<32x32xf32, #tpu.memory_space<vmem>>, vector<32x32xf32>
    %c0_13 = arith.constant 0 : index
    %c0_14 = arith.constant 0 : index
    %7 = vector.load %arg2[%c0_13, %c0_14] : memref<16x32xf32, #tpu.memory_space<vmem>>, vector<16x32xf32>
    %cst = arith.constant dense<0.000000e+00> : vector<16x32xf32>
    %8 = tpu.matmul %5, %7, %cst {dimension_numbers = #tpu.dot_dimension_numbers<[1], [0], [0], [1], [0, 0, 1, 1], [], []>} : vector<16x16xf32>, vector<16x32xf32>, vector<16x32xf32> -> vector<16x32xf32>
    %9 = vector.broadcast %2 : vector<1x32xf32> to vector<16x32xf32>
    %10 = arith.addf %8, %9 : vector<16x32xf32>
    %cst_15 = arith.constant dense<0.000000e+00> : vector<16xf32>
    %11 = vector.multi_reduction <add>, %10, %cst_15 [1] : vector<16x32xf32> to vector<16xf32>
    %12 = vector.shape_cast %11 : vector<16xf32> to vector<16x1xf32>
    %cst_16 = arith.constant 3.200000e+01 : f32
    %13 = vector.broadcast %cst_16 : f32 to vector<16x1xf32>
    %14 = arith.divf %12, %13 : vector<16x1xf32>
    %15 = vector.broadcast %14 : vector<16x1xf32> to vector<16x32xf32>
    %16 = arith.subf %10, %15 : vector<16x32xf32>
    %17 = arith.mulf %16, %16 : vector<16x32xf32>
    %cst_17 = arith.constant dense<0.000000e+00> : vector<16xf32>
    %18 = vector.multi_reduction <add>, %17, %cst_17 [1] : vector<16x32xf32> to vector<16xf32>
    %19 = vector.shape_cast %18 : vector<16xf32> to vector<16x1xf32>
    %cst_18 = arith.constant 3.200000e+01 : f32
    %20 = vector.broadcast %cst_18 : f32 to vector<16x1xf32>
    %21 = arith.divf %19, %20 : vector<16x1xf32>
    %22 = vector.broadcast %14 : vector<16x1xf32> to vector<16x32xf32>
    %23 = arith.subf %10, %22 : vector<16x32xf32>
    %cst_19 = arith.constant 9.99999974E-6 : f32
    %24 = vector.broadcast %cst_19 : f32 to vector<16x1xf32>
    %25 = arith.addf %21, %24 : vector<16x1xf32>
    %26 = math.rsqrt %25 : vector<16x1xf32>
    %27 = vector.broadcast %26 : vector<16x1xf32> to vector<16x32xf32>
    %28 = arith.mulf %23, %27 : vector<16x32xf32>
    %29 = vector.broadcast %0 : vector<1x32xf32> to vector<16x32xf32>
    %30 = arith.mulf %28, %29 : vector<16x32xf32>
    %31 = vector.broadcast %1 : vector<1x32xf32> to vector<16x32xf32>
    %32 = arith.addf %30, %31 : vector<16x32xf32>
    %cst_20 = arith.constant 0.000000e+00 : f32
    %33 = vector.broadcast %cst_20 : f32 to vector<16x32xf32>
    %34 = arith.maximumf %32, %33 : vector<16x32xf32>
    %c0_i32 = arith.constant 0 : i32
    %cst_21 = arith.constant dense<0.000000e+00> : vector<16x32xf32>
    %35 = tpu.matmul %34, %6, %cst_21 {dimension_numbers = #tpu.dot_dimension_numbers<[1], [0], [0], [1], [0, 0, 1, 1], [], []>} : vector<16x32xf32>, vector<32x32xf32>, vector<16x32xf32> -> vector<16x32xf32>
    %36 = vector.broadcast %3 : vector<1x32xf32> to vector<16x32xf32>
    %37 = arith.addf %35, %36 : vector<16x32xf32>
    %cst_22 = arith.constant dense<0.000000e+00> : vector<16xf32>
    %38 = vector.multi_reduction <add>, %37, %cst_22 [1] : vector<16x32xf32> to vector<16xf32>
    %39 = vector.shape_cast %38 : vector<16xf32> to vector<16x1xf32>
    %cst_23 = arith.constant 3.200000e+01 : f32
    %40 = vector.broadcast %cst_23 : f32 to vector<16x1xf32>
    %41 = arith.divf %39, %40 : vector<16x1xf32>
    %42 = vector.broadcast %41 : vector<16x1xf32> to vector<16x32xf32>
    %43 = arith.subf %37, %42 : vector<16x32xf32>
    %44 = arith.mulf %43, %43 : vector<16x32xf32>
    %cst_24 = arith.constant dense<0.000000e+00> : vector<16xf32>
    %45 = vector.multi_reduction <add>, %44, %cst_24 [1] : vector<16x32xf32> to vector<16xf32>
    %46 = vector.shape_cast %45 : vector<16xf32> to vector<16x1xf32>
    %cst_25 = arith.constant 3.200000e+01 : f32
    %47 = vector.broadcast %cst_25 : f32 to vector<16x1xf32>
    %48 = arith.divf %46, %47 : vector<16x1xf32>
    %49 = vector.broadcast %41 : vector<16x1xf32> to vector<16x32xf32>
    %50 = arith.subf %37, %49 : vector<16x32xf32>
    %cst_26 = arith.constant 9.99999974E-6 : f32
    %51 = vector.broadcast %cst_26 : f32 to vector<16x1xf32>
    %52 = arith.addf %48, %51 : vector<16x1xf32>
    %53 = math.rsqrt %52 : vector<16x1xf32>
    %54 = vector.broadcast %53 : vector<16x1xf32> to vector<16x32xf32>
    %55 = arith.mulf %50, %54 : vector<16x32xf32>
    %56 = vector.broadcast %0 : vector<1x32xf32> to vector<16x32xf32>
    %57 = arith.mulf %55, %56 : vector<16x32xf32>
    %58 = vector.broadcast %1 : vector<1x32xf32> to vector<16x32xf32>
    %59 = arith.addf %57, %58 : vector<16x32xf32>
    %cst_27 = arith.constant 0.000000e+00 : f32
    %60 = vector.broadcast %cst_27 : f32 to vector<16x32xf32>
    %61 = arith.maximumf %59, %60 : vector<16x32xf32>
    %c1_i32 = arith.constant 1 : i32
    %cst_28 = arith.constant dense<0.000000e+00> : vector<16x32xf32>
    %62 = tpu.matmul %61, %6, %cst_28 {dimension_numbers = #tpu.dot_dimension_numbers<[1], [0], [0], [1], [0, 0, 1, 1], [], []>} : vector<16x32xf32>, vector<32x32xf32>, vector<16x32xf32> -> vector<16x32xf32>
    %63 = vector.broadcast %3 : vector<1x32xf32> to vector<16x32xf32>
    %64 = arith.addf %62, %63 : vector<16x32xf32>
    %cst_29 = arith.constant dense<0.000000e+00> : vector<16xf32>
    %65 = vector.multi_reduction <add>, %64, %cst_29 [1] : vector<16x32xf32> to vector<16xf32>
    %66 = vector.shape_cast %65 : vector<16xf32> to vector<16x1xf32>
    %cst_30 = arith.constant 3.200000e+01 : f32
    %67 = vector.broadcast %cst_30 : f32 to vector<16x1xf32>
    %68 = arith.divf %66, %67 : vector<16x1xf32>
    %69 = vector.broadcast %68 : vector<16x1xf32> to vector<16x32xf32>
    %70 = arith.subf %64, %69 : vector<16x32xf32>
    %71 = arith.mulf %70, %70 : vector<16x32xf32>
    %cst_31 = arith.constant dense<0.000000e+00> : vector<16xf32>
    %72 = vector.multi_reduction <add>, %71, %cst_31 [1] : vector<16x32xf32> to vector<16xf32>
    %73 = vector.shape_cast %72 : vector<16xf32> to vector<16x1xf32>
    %cst_32 = arith.constant 3.200000e+01 : f32
    %74 = vector.broadcast %cst_32 : f32 to vector<16x1xf32>
    %75 = arith.divf %73, %74 : vector<16x1xf32>
    %76 = vector.broadcast %68 : vector<16x1xf32> to vector<16x32xf32>
    %77 = arith.subf %64, %76 : vector<16x32xf32>
    %cst_33 = arith.constant 9.99999974E-6 : f32
    %78 = vector.broadcast %cst_33 : f32 to vector<16x1xf32>
    %79 = arith.addf %75, %78 : vector<16x1xf32>
    %80 = math.rsqrt %79 : vector<16x1xf32>
    %81 = vector.broadcast %80 : vector<16x1xf32> to vector<16x32xf32>
    %82 = arith.mulf %77, %81 : vector<16x32xf32>
    %83 = vector.broadcast %0 : vector<1x32xf32> to vector<16x32xf32>
    %84 = arith.mulf %82, %83 : vector<16x32xf32>
    %85 = vector.broadcast %1 : vector<1x32xf32> to vector<16x32xf32>
    %86 = arith.addf %84, %85 : vector<16x32xf32>
    %cst_34 = arith.constant 0.000000e+00 : f32
    %87 = vector.broadcast %cst_34 : f32 to vector<16x32xf32>
    %88 = arith.maximumf %86, %87 : vector<16x32xf32>
    %c0_35 = arith.constant 0 : index
    %c0_36 = arith.constant 0 : index
    %89 = vector.load %arg6[%c0_35, %c0_36] : memref<32x128xf32, #tpu.memory_space<vmem>>, vector<32x128xf32>
    %cst_37 = arith.constant dense<0.000000e+00> : vector<16x128xf32>
    %90 = tpu.matmul %88, %89, %cst_37 {dimension_numbers = #tpu.dot_dimension_numbers<[1], [0], [0], [1], [0, 0, 1, 1], [], []>} : vector<16x32xf32>, vector<32x128xf32>, vector<16x128xf32> -> vector<16x128xf32>
    %91 = vector.broadcast %4 : vector<1x128xf32> to vector<16x128xf32>
    %92 = arith.addf %90, %91 : vector<16x128xf32>
    %c0_38 = arith.constant 0 : index
    %c0_39 = arith.constant 0 : index
    %93 = vector.load %arg10[%c0_38, %c0_39] : memref<16x128xf32, #tpu.memory_space<vmem>>, vector<16x128xf32>
    tpu.vector_store %arg10[%c0_38, %c0_39], %92 {strides = array<i32>} : memref<16x128xf32, #tpu.memory_space<vmem>>, vector<16x128xf32>,
    return
  }
  func.func @transform_0(%arg0: i32) -> (i32, i32) {
    %c0_i32 = arith.constant 0 : i32
    %c0_i32_0 = arith.constant 0 : i32
    return %arg0, %c0_i32 : i32, i32
  }
  func.func @transform_1(%arg0: i32) -> (i32, i32) {
    %c0_i32 = arith.constant 0 : i32
    %c0_i32_0 = arith.constant 0 : i32
    %c0_i32_1 = arith.constant 0 : i32
    return %c0_i32, %c0_i32_0 : i32, i32
  }
  func.func @transform_2(%arg0: i32) -> (i32, i32) {
    %c0_i32 = arith.constant 0 : i32
    %c0_i32_0 = arith.constant 0 : i32
    %c0_i32_1 = arith.constant 0 : i32
    return %c0_i32, %c0_i32_0 : i32, i32
  }
  func.func @transform_3(%arg0: i32) -> (i32, i32) {
    %c0_i32 = arith.constant 0 : i32
    %c0_i32_0 = arith.constant 0 : i32
    %c0_i32_1 = arith.constant 0 : i32
    return %c0_i32, %c0_i32_0 : i32, i32
  }
  func.func @transform_4(%arg0: i32) -> (i32, i32) {
    %c0_i32 = arith.constant 0 : i32
    %c0_i32_0 = arith.constant 0 : i32
    %c0_i32_1 = arith.constant 0 : i32
    return %c0_i32, %c0_i32_0 : i32, i32
  }
  func.func @transform_5(%arg0: i32) -> (i32, i32) {
    %c0_i32 = arith.constant 0 : i32
    %c0_i32_0 = arith.constant 0 : i32
    %c0_i32_1 = arith.constant 0 : i32
    return %c0_i32, %c0_i32_0 : i32, i32
  }
  func.func @transform_6(%arg0: i32) -> (i32, i32) {
    %c0_i32 = arith.constant 0 : i32
    %c0_i32_0 = arith.constant 0 : i32
    %c0_i32_1 = arith.constant 0 : i32
    return %c0_i32, %c0_i32_0 : i32, i32
  }
  func.func @transform_7(%arg0: i32) -> (i32, i32) {
    %c0_i32 = arith.constant 0 : i32
    %c0_i32_0 = arith.constant 0 : i32
    %c0_i32_1 = arith.constant 0 : i32
    return %c0_i32, %c0_i32_0 : i32, i32
  }
  func.func @transform_8(%arg0: i32) -> (i32, i32) {
    %c0_i32 = arith.constant 0 : i32
    %c0_i32_0 = arith.constant 0 : i32
    %c0_i32_1 = arith.constant 0 : i32
    return %c0_i32, %c0_i32_0 : i32, i32
  }
  func.func @transform_9(%arg0: i32) -> (i32, i32) {
    %c0_i32 = arith.constant 0 : i32
    %c0_i32_0 = arith.constant 0 : i32
    return %arg0, %c0_i32 : i32, i32
  }
}

module attributes {stable_mosaic.version = 11 : i64} {
  func.func @mlp_kernel(%arg0: i32, %arg1: memref<16x16xf32, #tpu.memory_space<vmem>>, %arg2: memref<16x32xf32, #tpu.memory_space<vmem>>, %arg3: memref<1x32xf32, #tpu.memory_space<vmem>>, %arg4: memref<32x32xf32, #tpu.memory_space<vmem>>, %arg5: memref<1x32xf32, #tpu.memory_space<vmem>>, %arg6: memref<32x128xf32, #tpu.memory_space<vmem>>, %arg7: memref<1x128xf32, #tpu.memory_space<vmem>>, %arg8: memref<1x32xf32, #tpu.memory_space<vmem>>, %arg9: memref<1x32xf32, #tpu.memory_space<vmem>>, %arg10: memref<16x128xf32, #tpu.memory_space<vmem>>) attributes {dimension_semantics = [#tpu.dimension_semantics<parallel>], iteration_bounds = array<i64: 1>, scalar_prefetch = 0 : i64, scratch_operands = 0 : i64, tpu.core_type = #tpu.core_type<tc>, window_params = [{transform_indices = @transform_0, window_bounds = array<i64: 16, 16>}, {pipeline_mode = #tpu.pipeline_mode<synchronous>, transform_indices = @transform_1, window_bounds = array<i64: 16, 32>}, {pipeline_mode = #tpu.pipeline_mode<synchronous>, transform_indices = @transform_2, window_bounds = array<i64: 1, 32>}, {pipeline_mode = #tpu.pipeline_mode<synchronous>, transform_indices = @transform_3, window_bounds = array<i64: 32, 32>}, {pipeline_mode = #tpu.pipeline_mode<synchronous>, transform_indices = @transform_4, window_bounds = array<i64: 1, 32>}, {pipeline_mode = #tpu.pipeline_mode<synchronous>, transform_indices = @transform_5, window_bounds = array<i64: 32, 128>}, {pipeline_mode = #tpu.pipeline_mode<synchronous>, transform_indices = @transform_6, window_bounds = array<i64: 1, 128>}, {pipeline_mode = #tpu.pipeline_mode<synchronous>, transform_indices = @transform_7, window_bounds = array<i64: 1, 32>}, {pipeline_mode = #tpu.pipeline_mode<synchronous>, transform_indices = @transform_8, window_bounds = array<i64: 1, 32>}, {transform_indices = @transform_9, window_bounds = array<i64: 16, 128>}]} {
    %c0 = arith.constant 0 : index
    %c0_0 = arith.constant 0 : index
    %0 = vector.load %arg8[%c0, %c0_0] : memref<1x32xf32, #tpu.memory_space<vmem>>, vector<1x32xf32>
    %c0_1 = arith.constant 0 : index
    %c0_2 = arith.constant 0 : index
    %1 = vector.load %arg9[%c0_1, %c0_2] : memref<1x32xf32, #tpu.memory_space<vmem>>, vector<1x32xf32>
    %c0_3 = arith.constant 0 : index
    %c0_4 = arith.constant 0 : index
    %2 = vector.load %arg3[%c0_3, %c0_4] : memref<1x32xf32, #tpu.memory_space<vmem>>, vector<1x32xf32>
    %c0_5 = arith.constant 0 : index
    %c0_6 = arith.constant 0 : index
    %3 = vector.load %arg5[%c0_5, %c0_6] : memref<1x32xf32, #tpu.memory_space<vmem>>, vector<1x32xf32>
    %c0_7 = arith.constant 0 : index
    %c0_8 = arith.constant 0 : index
    %4 = vector.load %arg7[%c0_7, %c0_8] : memref<1x128xf32, #tpu.memory_space<vmem>>, vector<1x128xf32>
    %c0_9 = arith.constant 0 : index
    %c0_10 = arith.constant 0 : index
    %5 = vector.load %arg1[%c0_9, %c0_10] : memref<16x16xf32, #tpu.memory_space<vmem>>, vector<16x16xf32>
    %c0_11 = arith.constant 0 : index
    %c0_12 = arith.constant 0 : index
    %6 = vector.load %arg4[%c0_11, %c0_12] : memref<32x32xf32, #tpu.memory_space<vmem>>, vector<32x32xf32>
    %c0_13 = arith.constant 0 : index
    %c0_14 = arith.constant 0 : index
    %7 = vector.load %arg2[%c0_13, %c0_14] : memref<16x32xf32, #tpu.memory_space<vmem>>, vector<16x32xf32>
    %cst = arith.constant dense<0.000000e+00> : vector<16x32xf32>
    %8 = tpu.matmul %5, %7, %cst {dimension_numbers = #tpu.dot_dimension_numbers<[1], [0], [0], [1], [0, 0, 1, 1], [], []>} : vector<16x16xf32>, vector<16x32xf32>, vector<16x32xf32> -> vector<16x32xf32>
    %9 = vector.broadcast %2 : vector<1x32xf32> to vector<16x32xf32>
    %10 = arith.addf %8, %9 : vector<16x32xf32>
    %cst_15 = arith.constant dense<0.000000e+00> : vector<16xf32>
    %11 = vector.multi_reduction <add>, %10, %cst_15 [1] : vector<16x32xf32> to vector<16xf32>
    %12 = vector.shape_cast %11 : vector<16xf32> to vector<16x1xf32>
    %cst_16 = arith.constant 3.200000e+01 : f32
    %13 = vector.broadcast %cst_16 : f32 to vector<16x1xf32>
    %14 = arith.divf %12, %13 : vector<16x1xf32>
    %15 = vector.broadcast %14 : vector<16x1xf32> to vector<16x32xf32>
    %16 = arith.subf %10, %15 : vector<16x32xf32>
    %17 = arith.mulf %16, %16 : vector<16x32xf32>
    %cst_17 = arith.constant dense<0.000000e+00> : vector<16xf32>
    %18 = vector.multi_reduction <add>, %17, %cst_17 [1] : vector<16x32xf32> to vector<16xf32>
    %19 = vector.shape_cast %18 : vector<16xf32> to vector<16x1xf32>
    %cst_18 = arith.constant 3.200000e+01 : f32
    %20 = vector.broadcast %cst_18 : f32 to vector<16x1xf32>
    %21 = arith.divf %19, %20 : vector<16x1xf32>
    %22 = vector.broadcast %14 : vector<16x1xf32> to vector<16x32xf32>
    %23 = arith.subf %10, %22 : vector<16x32xf32>
    %cst_19 = arith.constant 9.99999974E-6 : f32
    %24 = vector.broadcast %cst_19 : f32 to vector<16x1xf32>
    %25 = arith.addf %21, %24 : vector<16x1xf32>
    %26 = math.rsqrt %25 : vector<16x1xf32>
    %27 = vector.broadcast %26 : vector<16x1xf32> to vector<16x32xf32>
    %28 = arith.mulf %23, %27 : vector<16x32xf32>
    %29 = vector.broadcast %0 : vector<1x32xf32> to vector<16x32xf32>
    %30 = arith.mulf %28, %29 : vector<16x32xf32>
    %31 = vector.broadcast %1 : vector<1x32xf32> to vector<16x32xf32>
    %32 = arith.addf %30, %31 : vector<16x32xf32>
    %cst_20 = arith.constant 0.000000e+00 : f32
    %33 = vector.broadcast %cst_20 : f32 to vector<16x32xf32>
    %34 = arith.maximumf %32, %33 : vector<16x32xf32>
    %c0_i32 = arith.constant 0 : i32
    %cst_21 = arith.constant dense<0.000000e+00> : vector<16x32xf32>
    %35 = tpu.matmul %34, %6, %cst_21 {dimension_numbers = #tpu.dot_dimension_numbers<[1], [0], [0], [1], [0, 0, 1, 1], [], []>} : vector<16x32xf32>, vector<32x32xf32>, vector<16x32xf32> -> vector<16x32xf32>
    %36 = vector.broadcast %3 : vector<1x32xf32> to vector<16x32xf32>
    %37 = arith.addf %35, %36 : vector<16x32xf32>
    %cst_22 = arith.constant dense<0.000000e+00> : vector<16xf32>
    %38 = vector.multi_reduction <add>, %37, %cst_22 [1] : vector<16x32xf32> to vector<16xf32>
    %39 = vector.shape_cast %38 : vector<16xf32> to vector<16x1xf32>
    %cst_23 = arith.constant 3.200000e+01 : f32
    %40 = vector.broadcast %cst_23 : f32 to vector<16x1xf32>
    %41 = arith.divf %39, %40 : vector<16x1xf32>
    %42 = vector.broadcast %41 : vector<16x1xf32> to vector<16x32xf32>
    %43 = arith.subf %37, %42 : vector<16x32xf32>
    %44 = arith.mulf %43, %43 : vector<16x32xf32>
    %cst_24 = arith.constant dense<0.000000e+00> : vector<16xf32>
    %45 = vector.multi_reduction <add>, %44, %cst_24 [1] : vector<16x32xf32> to vector<16xf32>
    %46 = vector.shape_cast %45 : vector<16xf32> to vector<16x1xf32>
    %cst_25 = arith.constant 3.200000e+01 : f32
    %47 = vector.broadcast %cst_25 : f32 to vector<16x1xf32>
    %48 = arith.divf %46, %47 : vector<16x1xf32>
    %49 = vector.broadcast %41 : vector<16x1xf32> to vector<16x32xf32>
    %50 = arith.subf %37, %49 : vector<16x32xf32>
    %cst_26 = arith.constant 9.99999974E-6 : f32
    %51 = vector.broadcast %cst_26 : f32 to vector<16x1xf32>
    %52 = arith.addf %48, %51 : vector<16x1xf32>
    %53 = math.rsqrt %52 : vector<16x1xf32>
    %54 = vector.broadcast %53 : vector<16x1xf32> to vector<16x32xf32>
    %55 = arith.mulf %50, %54 : vector<16x32xf32>
    %56 = vector.broadcast %0 : vector<1x32xf32> to vector<16x32xf32>
    %57 = arith.mulf %55, %56 : vector<16x32xf32>
    %58 = vector.broadcast %1 : vector<1x32xf32> to vector<16x32xf32>
    %59 = arith.addf %57, %58 : vector<16x32xf32>
    %cst_27 = arith.constant 0.000000e+00 : f32
    %60 = vector.broadcast %cst_27 : f32 to vector<16x32xf32>
    %61 = arith.maximumf %59, %60 : vector<16x32xf32>
    %c1_i32 = arith.constant 1 : i32
    %cst_28 = arith.constant dense<0.000000e+00> : vector<16x32xf32>
    %62 = tpu.matmul %61, %6, %cst_28 {dimension_numbers = #tpu.dot_dimension_numbers<[1], [0], [0], [1], [0, 0, 1, 1], [], []>} : vector<16x32xf32>, vector<32x32xf32>, vector<16x32xf32> -> vector<16x32xf32>
    %63 = vector.broadcast %3 : vector<1x32xf32> to vector<16x32xf32>
    %64 = arith.addf %62, %63 : vector<16x32xf32>
    %cst_29 = arith.constant dense<0.000000e+00> : vector<16xf32>
    %65 = vector.multi_reduction <add>, %64, %cst_29 [1] : vector<16x32xf32> to vector<16xf32>
    %66 = vector.shape_cast %65 : vector<16xf32> to vector<16x1xf32>
    %cst_30 = arith.constant 3.200000e+01 : f32
    %67 = vector.broadcast %cst_30 : f32 to vector<16x1xf32>
    %68 = arith.divf %66, %67 : vector<16x1xf32>
    %69 = vector.broadcast %68 : vector<16x1xf32> to vector<16x32xf32>
    %70 = arith.subf %64, %69 : vector<16x32xf32>
    %71 = arith.mulf %70, %70 : vector<16x32xf32>
    %cst_31 = arith.constant dense<0.000000e+00> : vector<16xf32>
    %72 = vector.multi_reduction <add>, %71, %cst_31 [1] : vector<16x32xf32> to vector<16xf32>
    %73 = vector.shape_cast %72 : vector<16xf32> to vector<16x1xf32>
    %cst_32 = arith.constant 3.200000e+01 : f32
    %74 = vector.broadcast %cst_32 : f32 to vector<16x1xf32>
    %75 = arith.divf %73, %74 : vector<16x1xf32>
    %76 = vector.broadcast %68 : vector<16x1xf32> to vector<16x32xf32>
    %77 = arith.subf %64, %76 : vector<16x32xf32>
    %cst_33 = arith.constant 9.99999974E-6 : f32
    %78 = vector.broadcast %cst_33 : f32 to vector<16x1xf32>
    %79 = arith.addf %75, %78 : vector<16x1xf32>
    %80 = math.rsqrt %79 : vector<16x1xf32>
    %81 = vector.broadcast %80 : vector<16x1xf32> to vector<16x32xf32>
    %82 = arith.mulf %77, %81 : vector<16x32xf32>
    %83 = vector.broadcast %0 : vector<1x32xf32> to vector<16x32xf32>
    %84 = arith.mulf %82, %83 : vector<16x32xf32>
    %85 = vector.broadcast %1 : vector<1x32xf32> to vector<16x32xf32>
    %86 = arith.addf %84, %85 : vector<16x32xf32>
    %cst_34 = arith.constant 0.000000e+00 : f32
    %87 = vector.broadcast %cst_34 : f32 to vector<16x32xf32>
    %88 = arith.maximumf %86, %87 : vector<16x32xf32>
    %c0_35 = arith.constant 0 : index
    %c0_36 = arith.constant 0 : index
    %89 = vector.load %arg6[%c0_35, %c0_36] : memref<32x128xf32, #tpu.memory_space<vmem>>, vector<32x128xf32>
    %cst_37 = arith.constant dense<0.000000e+00> : vector<16x128xf32>
    %90 = tpu.matmul %88, %89, %cst_37 {dimension_numbers = #tpu.dot_dimension_numbers<[1], [0], [0], [1], [0, 0, 1, 1], [], []>} : vector<16x32xf32>, vector<32x128xf32>, vector<16x128xf32> -> vector<16x128xf32>
    %91 = vector.broadcast %4 : vector<1x128xf32> to vector<16x128xf32>
    %92 = arith.addf %90, %91 : vector<16x128xf32>
    %c0_38 = arith.constant 0 : index
    %c0_39 = arith.constant 0 : index
    %93 = vector.load %arg10[%c0_38, %c0_39] : memref<16x128xf32, #tpu.memory_space<vmem>>, vector<16x128xf32>
    tpu.vector_store %arg10[%c0_38, %c0_39], %92 {strides = array<i32>} : memref<16x128xf32, #tpu.memory_space<vmem>>, vector<16x128xf32>,
    return
  }
  func.func @transform_0(%arg0: i32) -> (i32, i32) {
    %c0_i32 = arith.constant 0 : i32
    %c0_i32_0 = arith.constant 0 : i32
    return %arg0, %c0_i32 : i32, i32
  }
  func.func @transform_1(%arg0: i32) -> (i32, i32) {
    %c0_i32 = arith.constant 0 : i32
    %c0_i32_0 = arith.constant 0 : i32
    %c0_i32_1 = arith.constant 0 : i32
    return %c0_i32, %c0_i32_0 : i32, i32
  }
  func.func @transform_2(%arg0: i32) -> (i32, i32) {
    %c0_i32 = arith.constant 0 : i32
    %c0_i32_0 = arith.constant 0 : i32
    %c0_i32_1 = arith.constant 0 : i32
    return %c0_i32, %c0_i32_0 : i32, i32
  }
  func.func @transform_3(%arg0: i32) -> (i32, i32) {
    %c0_i32 = arith.constant 0 : i32
    %c0_i32_0 = arith.constant 0 : i32
    %c0_i32_1 = arith.constant 0 : i32
    return %c0_i32, %c0_i32_0 : i32, i32
  }
  func.func @transform_4(%arg0: i32) -> (i32, i32) {
    %c0_i32 = arith.constant 0 : i32
    %c0_i32_0 = arith.constant 0 : i32
    %c0_i32_1 = arith.constant 0 : i32
    return %c0_i32, %c0_i32_0 : i32, i32
  }
  func.func @transform_5(%arg0: i32) -> (i32, i32) {
    %c0_i32 = arith.constant 0 : i32
    %c0_i32_0 = arith.constant 0 : i32
    %c0_i32_1 = arith.constant 0 : i32
    return %c0_i32, %c0_i32_0 : i32, i32
  }
  func.func @transform_6(%arg0: i32) -> (i32, i32) {
    %c0_i32 = arith.constant 0 : i32
    %c0_i32_0 = arith.constant 0 : i32
    %c0_i32_1 = arith.constant 0 : i32
    return %c0_i32, %c0_i32_0 : i32, i32
  }
  func.func @transform_7(%arg0: i32) -> (i32, i32) {
    %c0_i32 = arith.constant 0 : i32
    %c0_i32_0 = arith.constant 0 : i32
    %c0_i32_1 = arith.constant 0 : i32
    return %c0_i32, %c0_i32_0 : i32, i32
  }
  func.func @transform_8(%arg0: i32) -> (i32, i32) {
    %c0_i32 = arith.constant 0 : i32
    %c0_i32_0 = arith.constant 0 : i32
    %c0_i32_1 = arith.constant 0 : i32
    return %c0_i32, %c0_i32_0 : i32, i32
  }
  func.func @transform_9(%arg0: i32) -> (i32, i32) {
    %c0_i32 = arith.constant 0 : i32
    %c0_i32_0 = arith.constant 0 : i32
    return %arg0, %c0_i32 : i32, i32
  }
}

</mosaic_0001>

<llo_original>
// kernel: tpu_custom_call.1
$region0: #{tpu_custom_call.1}
  #allocation0 [shape = 'u32[]', space=smem, size = 0x4, offset = 0x4, fixed_abs, tag = 'smem constant byte address 0x4 - core index']
  #allocation1 [shape = 'u32[144,128]{1,0:T(1,128)}', space=vmem, size = 0x12000, scoped, tag = 'internal scratch']
  %s0 = inlined_call_operand.hbm [shape: f32[16,16], index: 0, kind: input, shape index: {}]
  %s1 = inlined_call_operand.hbm [shape: f32[16,32], index: 1, kind: input, shape index: {}]
  %s2 = inlined_call_operand.vmem [shape: f32[1,32], index: 2, kind: input, shape index: {}]
  %s3 = inlined_call_operand.hbm [shape: f32[32,32], index: 3, kind: input, shape index: {}]
  %s4 = inlined_call_operand.vmem [shape: f32[1,32], index: 4, kind: input, shape index: {}]
  %s5 = inlined_call_operand.hbm [shape: f32[32,128], index: 5, kind: input, shape index: {}]
  %s6 = inlined_call_operand.vmem [shape: f32[1,128], index: 6, kind: input, shape index: {}]
  %s7 = inlined_call_operand.vmem [shape: f32[1,32], index: 7, kind: input, shape index: {}]
  %s8 = inlined_call_operand.vmem [shape: f32[1,32], index: 8, kind: input, shape index: {}]
  %s9 = inlined_call_operand.hbm [shape: f32[16,128], index: 9, kind: output, shape index: {}]
  %s10 = sld [smem:[#allocation0]]
  $region62: #{tpu_custom_call.1} parent=0
    _
  %s12 = ssub.s32 1, %s10
  %s13 = scalar_select 0, %s12, %s10
  $region1: #{tpu_custom_call.1} parent=0
    #allocation2 [shape = 'u8[8192]{0}', space=vmem, size = 0x2000, scoped, tag = 'input window, operand 0, single buffered']
    #allocation3 [shape = 's32[1]{0}', space=sflag, size = 0x4, scoped, tag = 'scoped memory for tpu_custom_call.1']
    #allocation4 [shape = 's32[1]{0}', space=sflag, size = 0x4, scoped, tag = 'scoped memory for tpu_custom_call.1']
    #allocation5 [shape = 'u8[8192]{0}', space=vmem, size = 0x2000, scoped, tag = 'input window, operand 1, single buffered']
    #allocation6 [shape = 's32[1]{0}', space=sflag, size = 0x4, scoped, tag = 'scoped memory for tpu_custom_call.1']
    #allocation7 [shape = 'u8[16384]{0}', space=vmem, size = 0x4000, scoped, tag = 'input window, operand 3, single buffered']
    #allocation8 [shape = 'u8[16384]{0}', space=vmem, size = 0x4000, scoped, tag = 'input window, operand 5, single buffered']
    #allocation9 [shape = 's32[1]{0}', space=sflag, size = 0x4, scoped, tag = 'scoped memory for tpu_custom_call.1']
    #allocation10 [shape = 'u8[8192]{0}', space=vmem, size = 0x2000, scoped, tag = 'output window, operand 0, single buffered']
    %14 = vsyncpa [#allocation3], 0
    %15 = vsyncpa [#allocation6], 0
    %16 = vsyncpa [#allocation9], 0
    %17 = vsyncpa [#allocation4], 0
    // Predicated region
    $region2: #{tpu_custom_call.1} parent=1 // pred_check
      _
    $region3: #{tpu_custom_call.1} parent=1 // pred_check_branch
      %19 = sbr.rel (0) target = $region5
    $region4: #{tpu_custom_call.1} parent=1 // pred_region
      %s21 = ssub.s32 256, 256
      %22 = vsyncadd [#allocation3], %s21
      %s23 = sshll.u32 [#allocation2], 4
      %s24 = int_to_ptr.vmem [resolvable:$true] %s23
      %29 = dma.hbm_to_vmem [thread:$0]  %s0, 256, %s24, [#allocation3], 128, 128, 8
    $region5: #{tpu_custom_call.1} parent=1 // pred_fallthru
      _
    // Predicated region
    $region6: #{tpu_custom_call.1} parent=1 // pred_check
      _
    $region7: #{tpu_custom_call.1} parent=1 // pred_check_branch
      %31 = sbr.rel (0) target = $region9
    $region8: #{tpu_custom_call.1} parent=1 // pred_region
      %s33 = ssub.s32 256, 256
      %34 = vsyncadd [#allocation6], %s33
      %s35 = sshll.u32 [#allocation5], 4
      %s36 = int_to_ptr.vmem [resolvable:$true] %s35
      %41 = dma.hbm_to_vmem [thread:$0]  %s1, 256, %s36, [#allocation6], 128, 128, 8
    $region9: #{tpu_custom_call.1} parent=1 // pred_fallthru
      _
    // Predicated region
    $region10: #{tpu_custom_call.1} parent=1 // pred_check
      _
    $region11: #{tpu_custom_call.1} parent=1 // pred_check_branch
      %43 = sbr.rel (0) target = $region13
    $region12: #{tpu_custom_call.1} parent=1 // pred_region
      _
    $region13: #{tpu_custom_call.1} parent=1 // pred_fallthru
      _
    // Predicated region
    $region14: #{tpu_custom_call.1} parent=1 // pred_check
      _
    $region15: #{tpu_custom_call.1} parent=1 // pred_check_branch
      %45 = sbr.rel (0) target = $region17
    $region16: #{tpu_custom_call.1} parent=1 // pred_region
      %s47 = ssub.s32 512, 512
      %48 = vsyncadd [#allocation6], %s47
      %s49 = sshll.u32 [#allocation7], 4
      %s50 = int_to_ptr.vmem [resolvable:$true] %s49
      %55 = dma.hbm_to_vmem [thread:$0]  %s3, 512, %s50, [#allocation6], 128, 128, 8
    $region17: #{tpu_custom_call.1} parent=1 // pred_fallthru
      _
    // Predicated region
    $region18: #{tpu_custom_call.1} parent=1 // pred_check
      _
    $region19: #{tpu_custom_call.1} parent=1 // pred_check_branch
      %57 = sbr.rel (0) target = $region21
    $region20: #{tpu_custom_call.1} parent=1 // pred_region
      _
    $region21: #{tpu_custom_call.1} parent=1 // pred_fallthru
      _
    // Predicated region
    $region22: #{tpu_custom_call.1} parent=1 // pred_check
      _
    $region23: #{tpu_custom_call.1} parent=1 // pred_check_branch
      %59 = sbr.rel (0) target = $region25
    $region24: #{tpu_custom_call.1} parent=1 // pred_region
      %s61 = ssub.s32 512, 512
      %62 = vsyncadd [#allocation9], %s61
      %s63 = sshll.u32 [#allocation8], 4
      %s64 = int_to_ptr.vmem [resolvable:$true] %s63
      %69 = dma.hbm_to_vmem [thread:$0]  %s5, 512, %s64, [#allocation9], 128, 128, 8
    $region25: #{tpu_custom_call.1} parent=1 // pred_fallthru
      _
    // Predicated region
    $region26: #{tpu_custom_call.1} parent=1 // pred_check
      _
    $region27: #{tpu_custom_call.1} parent=1 // pred_check_branch
      %71 = sbr.rel (0) target = $region29
    $region28: #{tpu_custom_call.1} parent=1 // pred_region
      _
    $region29: #{tpu_custom_call.1} parent=1 // pred_fallthru
      _
    // Predicated region
    $region30: #{tpu_custom_call.1} parent=1 // pred_check
      _
    $region31: #{tpu_custom_call.1} parent=1 // pred_check_branch
      %73 = sbr.rel (0) target = $region33
    $region32: #{tpu_custom_call.1} parent=1 // pred_region
      _
    $region33: #{tpu_custom_call.1} parent=1 // pred_fallthru
      _
    // Predicated region
    $region34: #{tpu_custom_call.1} parent=1 // pred_check
      _
    $region35: #{tpu_custom_call.1} parent=1 // pred_check_branch
      %75 = sbr.rel (0) target = $region37
    $region36: #{tpu_custom_call.1} parent=1 // pred_region
      _
    $region37: #{tpu_custom_call.1} parent=1 // pred_fallthru
      _
    // Predicated region
    $region38: #{tpu_custom_call.1} parent=1 // pred_check
      _
    $region39: #{tpu_custom_call.1} parent=1 // pred_check_branch
      %77 = sbr.rel (0) target = $region41
    $region40: #{tpu_custom_call.1} parent=1 // pred_region
      %78 = dma.done [#allocation3], 256
    $region41: #{tpu_custom_call.1} parent=1 // pred_fallthru
      _
    // Predicated region
    $region42: #{tpu_custom_call.1} parent=1 // pred_check
      _
    $region43: #{tpu_custom_call.1} parent=1 // pred_check_branch
      %80 = sbr.rel (0) target = $region45
    $region44: #{tpu_custom_call.1} parent=1 // pred_region
      %81 = dma.done [#allocation6], 256
    $region45: #{tpu_custom_call.1} parent=1 // pred_fallthru
      _
    // Predicated region
    $region46: #{tpu_custom_call.1} parent=1 // pred_check
      _
    $region47: #{tpu_custom_call.1} parent=1 // pred_check_branch
      %83 = sbr.rel (0) target = $region49
    $region48: #{tpu_custom_call.1} parent=1 // pred_region
      %84 = dma.done [#allocation6], 512
    $region49: #{tpu_custom_call.1} parent=1 // pred_fallthru
      _
    // Predicated region
    $region50: #{tpu_custom_call.1} parent=1 // pred_check
      _
    $region51: #{tpu_custom_call.1} parent=1 // pred_check_branch
      %86 = sbr.rel (0) target = $region53
    $region52: #{tpu_custom_call.1} parent=1 // pred_region
      %87 = dma.done [#allocation9], 512
    $region53: #{tpu_custom_call.1} parent=1 // pred_fallthru
      _
    %v88 = vld [vmem:[%s7] sm:$0x1]
    %v89 = vld [vmem:[%s8] sm:$0x1]
    %v90 = vld [vmem:[%s2] sm:$0x1]
    %v91 = vld [vmem:[%s4] sm:$0x1]
    %v92 = vld [vmem:[%s6] sm:$0x1]
    %v93 = vld [vmem:[#allocation2] sm:$0xff]
    %v94 = vld [vmem:[#allocation2 + $0x8] sm:$0xff]
    %v95 = vld [vmem:[#allocation7] sm:$0xff]
    %v96 = vld [vmem:[#allocation7 + $0x8] sm:$0xff]
    %v97 = vld [vmem:[#allocation7 + $0x10] sm:$0xff]
    %v98 = vld [vmem:[#allocation7 + $0x18] sm:$0xff]
    %v99 = vld [vmem:[#allocation5] sm:$0xff]
    %v100 = vld [vmem:[#allocation5 + $0x8] sm:$0xff]
    %v102 = vlaneseq
    %v103 = vshrl.u32 %v102, 7
    %v104 = vsub.s32 0, %v103
    %v105 = vrot.slane %v90, %v104
    %vm107 = vcmask 130048
    %v109 = vsel %vm107, %v93, 0
    %v112 = vsel %vm107, %v94, 0
    %114 = vmatprep.subr.mxu0 0.0
    %115 = vmatpush1.msra.mxu0 0.0
    %116 = vmatprep.subr.mxu0 0.0
    %117 = vmatpush1.msra.mxu0 0.0
    %118 = vmatprep.subr.mxu0 0.0
    %119 = vmatpush1.msra.mxu0 0.0
    %120 = vmatprep.subr.mxu0 0.0
    %121 = vmatpush1.msra.mxu0 0.0
    %122 = vmatprep.subr.mxu0 0.0
    %123 = vmatpush1.msra.mxu0 0.0
    %124 = vmatprep.subr.mxu0 0.0
    %125 = vmatpush1.msra.mxu0 0.0
    %126 = vmatprep.subr.mxu0 0.0
    %127 = vmatpush1.msra.mxu0 0.0
    %128 = vmatprep.subr.mxu0 0.0
    %129 = vmatpush1.msra.mxu0 0.0
    %130 = vmatprep.subr.mxu0 0.0
    %131 = vmatpush1.msra.mxu0 0.0
    %132 = vmatprep.subr.mxu0 0.0
    %133 = vmatpush1.msra.mxu0 0.0
    %134 = vmatprep.subr.mxu0 0.0
    %135 = vmatpush1.msra.mxu0 0.0
    %136 = vmatprep.subr.mxu0 0.0
    %137 = vmatpush1.msra.mxu0 0.0
    %138 = vmatprep.subr.mxu0 0.0
    %139 = vmatpush1.msra.mxu0 0.0
    %140 = vmatprep.subr.mxu0 0.0
    %141 = vmatpush1.msra.mxu0 0.0
    %142 = vmatprep.subr.mxu0 0.0
    %143 = vmatpush1.msra.mxu0 %v100
    %144 = vmatprep.subr.mxu0 0.0
    %145 = vmatpush1.msra.mxu0 %v99
    %146 = vmatprep.subr.mxu0 0.0
    %147 = vmatpush2.msra.mxu0 0.0
    %148 = vmatprep.subr.mxu0 0.0
    %149 = vmatpush2.msra.mxu0 0.0
    %150 = vmatprep.subr.mxu0 0.0
    %151 = vmatpush2.msra.mxu0 0.0
    %152 = vmatprep.subr.mxu0 0.0
    %153 = vmatpush2.msra.mxu0 0.0
    %154 = vmatprep.subr.mxu0 0.0
    %155 = vmatpush2.msra.mxu0 0.0
    %156 = vmatprep.subr.mxu0 0.0
    %157 = vmatpush2.msra.mxu0 0.0
    %158 = vmatprep.subr.mxu0 0.0
    %159 = vmatpush2.msra.mxu0 0.0
    %160 = vmatprep.subr.mxu0 0.0
    %161 = vmatpush2.msra.mxu0 0.0
    %162 = vmatprep.subr.mxu0 0.0
    %163 = vmatpush2.msra.mxu0 0.0
    %164 = vmatprep.subr.mxu0 0.0
    %165 = vmatpush2.msra.mxu0 0.0
    %166 = vmatprep.subr.mxu0 0.0
    %167 = vmatpush2.msra.mxu0 0.0
    %168 = vmatprep.subr.mxu0 0.0
    %169 = vmatpush2.msra.mxu0 0.0
    %170 = vmatprep.subr.mxu0 0.0
    %171 = vmatpush2.msra.mxu0 0.0
    %172 = vmatprep.subr.mxu0 0.0
    %173 = vmatpush2.msra.mxu0 0.0
    %174 = vmatprep.subr.mxu0 0.0
    %175 = vmatpush2.msra.mxu0 0.0
    %176 = vmatprep.subr.mxu0 0.0
    %177 = vmatpush2.msra.mxu0 0.0
    %178 = vmatprep.mubr.f32.mxu0 0.0
    %179 = vmatmul.mubr.f32.gmra.mxu0 %v109
    %v180 = vpop.f32.mrf.mxu0
    %v181 = vadd.f32 %v105, %v180
    %v182 = vpop.f32.mrf.mxu0
    %183 = vmatprep.mubr.f32.mxu0 0.0
    %184 = vmatmul.mubr.f32.gmra.mxu0 %v112
    %v185 = vpop.f32.mrf.mxu0
    %v186 = vadd.f32 %v105, %v185
    %v187 = vpop.f32.mrf.mxu0
    %188 = vdwg.mxu0
    %vm189 = vcmask 261120
    %v190 = vsel %vm189, %v181, 0.0
    %191 = vadd.xlane.f32.xlu0 %v190
    %v192 = vpop.xlane.xlu0 %191
    %v193 = vsel %vm189, %v186, 0.0
    %194 = vadd.xlane.f32.xlu0 %v193
    %v195 = vpop.xlane.xlu0 %194
    %v196 = vrcp.pop 32.0
    %v197 = vmul.f32 %v192, %v196
    %v198 = vmul.f32 %v195, %v196
    %v199 = vsub.f32 %v181, %v197
    %v200 = vsub.f32 %v186, %v198
    %v201 = vmul.f32 %v199, %v199
    %v202 = vmul.f32 %v200, %v200
    %v203 = vsel %vm189, %v201, 0.0
    %204 = vadd.xlane.f32.xlu0 %v203
    %v205 = vpop.xlane.xlu0 %204
    %v206 = vsel %vm189, %v202, 0.0
    %207 = vadd.xlane.f32.xlu0 %v206
    %v208 = vpop.xlane.xlu0 %207
    %v209 = vmul.f32 %v205, %v196
    %v210 = vmul.f32 %v208, %v196
    %v211 = vadd.f32 %v209, 1e-05
    %v212 = vadd.f32 %v210, 1e-05
    %v213 = vrsqrt.pop %v211
    %v214 = vrsqrt.pop %v212
    %v215 = vmul.f32 %v199, %v213
    %v216 = vmul.f32 %v200, %v214
    %v218 = vlaneseq
    %v219 = vshrl.u32 %v218, 7
    %v220 = vsub.s32 0, %v219
    %v221 = vrot.slane %v88, %v220
    %v223 = vmul.f32 %v215, %v221
    %v224 = vmul.f32 %v216, %v221
    %v226 = vlaneseq
    %v227 = vshrl.u32 %v226, 7
    %v228 = vsub.s32 0, %v227
    %v229 = vrot.slane %v89, %v228
    %v231 = vadd.f32 %v223, %v229
    %v232 = vadd.f32 %v224, %v229
    %v233 = vmax.f32 %v231, 0.0
    %v234 = vmax.f32 %v232, 0.0
    %v236 = vlaneseq
    %v237 = vshrl.u32 %v236, 7
    %v238 = vsub.s32 0, %v237
    %v239 = vrot.slane %v91, %v238
    %v242 = vsel %vm189, %v233, 0
    %v245 = vsel %vm189, %v234, 0
    %247 = vmatprep.subr.mxu0 0.0
    %248 = vmatpush1.msra.mxu0 0.0
    %249 = vmatprep.subr.mxu0 0.0
    %250 = vmatpush1.msra.mxu0 0.0
    %251 = vmatprep.subr.mxu0 0.0
    %252 = vmatpush1.msra.mxu0 0.0
    %253 = vmatprep.subr.mxu0 0.0
    %254 = vmatpush1.msra.mxu0 0.0
    %255 = vmatprep.subr.mxu0 0.0
    %256 = vmatpush1.msra.mxu0 0.0
    %257 = vmatprep.subr.mxu0 0.0
    %258 = vmatpush1.msra.mxu0 0.0
    %259 = vmatprep.subr.mxu0 0.0
    %260 = vmatpush1.msra.mxu0 0.0
    %261 = vmatprep.subr.mxu0 0.0
    %262 = vmatpush1.msra.mxu0 0.0
    %263 = vmatprep.subr.mxu0 0.0
    %264 = vmatpush1.msra.mxu0 0.0
    %265 = vmatprep.subr.mxu0 0.0
    %266 = vmatpush1.msra.mxu0 0.0
    %267 = vmatprep.subr.mxu0 0.0
    %268 = vmatpush1.msra.mxu0 0.0
    %269 = vmatprep.subr.mxu0 0.0
    %270 = vmatpush1.msra.mxu0 0.0
    %271 = vmatprep.subr.mxu0 0.0
    %272 = vmatpush1.msra.mxu0 %v98
    %273 = vmatprep.subr.mxu0 0.0
    %274 = vmatpush1.msra.mxu0 %v97
    %275 = vmatprep.subr.mxu0 0.0
    %276 = vmatpush1.msra.mxu0 %v96
    %277 = vmatprep.subr.mxu0 0.0
    %278 = vmatpush1.msra.mxu0 %v95
    %279 = vmatprep.subr.mxu0 0.0
    %280 = vmatpush2.msra.mxu0 0.0
    %281 = vmatprep.subr.mxu0 0.0
    %282 = vmatpush2.msra.mxu0 0.0
    %283 = vmatprep.subr.mxu0 0.0
    %284 = vmatpush2.msra.mxu0 0.0
    %285 = vmatprep.subr.mxu0 0.0
    %286 = vmatpush2.msra.mxu0 0.0
    %287 = vmatprep.subr.mxu0 0.0
    %288 = vmatpush2.msra.mxu0 0.0
    %289 = vmatprep.subr.mxu0 0.0
    %290 = vmatpush2.msra.mxu0 0.0
    %291 = vmatprep.subr.mxu0 0.0
    %292 = vmatpush2.msra.mxu0 0.0
    %293 = vmatprep.subr.mxu0 0.0
    %294 = vmatpush2.msra.mxu0 0.0
    %295 = vmatprep.subr.mxu0 0.0
    %296 = vmatpush2.msra.mxu0 0.0
    %297 = vmatprep.subr.mxu0 0.0
    %298 = vmatpush2.msra.mxu0 0.0
    %299 = vmatprep.subr.mxu0 0.0
    %300 = vmatpush2.msra.mxu0 0.0
    %301 = vmatprep.subr.mxu0 0.0
    %302 = vmatpush2.msra.mxu0 0.0
    %303 = vmatprep.subr.mxu0 0.0
    %304 = vmatpush2.msra.mxu0 0.0
    %305 = vmatprep.subr.mxu0 0.0
    %306 = vmatpush2.msra.mxu0 0.0
    %307 = vmatprep.subr.mxu0 0.0
    %308 = vmatpush2.msra.mxu0 0.0
    %309 = vmatprep.subr.mxu0 0.0
    %310 = vmatpush2.msra.mxu0 0.0
    %311 = vmatprep.mubr.f32.mxu0 0.0
    %312 = vmatmul.mubr.f32.gmra.mxu0 %v242
    %v313 = vpop.f32.mrf.mxu0
    %v314 = vadd.f32 %v239, %v313
    %v315 = vpop.f32.mrf.mxu0
    %316 = vmatprep.mubr.f32.mxu0 0.0
    %317 = vmatmul.mubr.f32.gmra.mxu0 %v245
    %v318 = vpop.f32.mrf.mxu0
    %v319 = vadd.f32 %v239, %v318
    %v320 = vpop.f32.mrf.mxu0
    %321 = vdwg.mxu0
    %v322 = vsel %vm189, %v314, 0.0
    %323 = vadd.xlane.f32.xlu0 %v322
    %v324 = vpop.xlane.xlu0 %323
    %v325 = vsel %vm189, %v319, 0.0
    %326 = vadd.xlane.f32.xlu0 %v325
    %v327 = vpop.xlane.xlu0 %326
    %v328 = vmul.f32 %v324, %v196
    %v329 = vmul.f32 %v327, %v196
    %v330 = vsub.f32 %v314, %v328
    %v331 = vsub.f32 %v319, %v329
    %v332 = vmul.f32 %v330, %v330
    %v333 = vmul.f32 %v331, %v331
    %v334 = vsel %vm189, %v332, 0.0
    %335 = vadd.xlane.f32.xlu0 %v334
    %v336 = vpop.xlane.xlu0 %335
    %v337 = vsel %vm189, %v333, 0.0
    %338 = vadd.xlane.f32.xlu0 %v337
    %v339 = vpop.xlane.xlu0 %338
    %v340 = vmul.f32 %v336, %v196
    %v341 = vmul.f32 %v339, %v196
    %v342 = vadd.f32 %v340, 1e-05
    %v343 = vadd.f32 %v341, 1e-05
    %v344 = vrsqrt.pop %v342
    %v345 = vrsqrt.pop %v343
    %v346 = vmul.f32 %v330, %v344
    %v347 = vmul.f32 %v331, %v345
    %v348 = vmul.f32 %v346, %v221
    %v349 = vmul.f32 %v347, %v221
    %v350 = vadd.f32 %v348, %v229
    %v351 = vadd.f32 %v349, %v229
    %v352 = vmax.f32 %v350, 0.0
    %v353 = vmax.f32 %v351, 0.0
    %v355 = vsel %vm189, %v352, 0
    %v358 = vsel %vm189, %v353, 0
    %360 = vmatprep.subr.mxu0 0.0
    %361 = vmatpush1.msra.mxu0 0.0
    %362 = vmatprep.subr.mxu0 0.0
    %363 = vmatpush1.msra.mxu0 0.0
    %364 = vmatprep.subr.mxu0 0.0
    %365 = vmatpush1.msra.mxu0 0.0
    %366 = vmatprep.subr.mxu0 0.0
    %367 = vmatpush1.msra.mxu0 0.0
    %368 = vmatprep.subr.mxu0 0.0
    %369 = vmatpush1.msra.mxu0 0.0
    %370 = vmatprep.subr.mxu0 0.0
    %371 = vmatpush1.msra.mxu0 0.0
    %372 = vmatprep.subr.mxu0 0.0
    %373 = vmatpush1.msra.mxu0 0.0
    %374 = vmatprep.subr.mxu0 0.0
    %375 = vmatpush1.msra.mxu0 0.0
    %376 = vmatprep.subr.mxu0 0.0
    %377 = vmatpush1.msra.mxu0 0.0
    %378 = vmatprep.subr.mxu0 0.0
    %379 = vmatpush1.msra.mxu0 0.0
    %380 = vmatprep.subr.mxu0 0.0
    %381 = vmatpush1.msra.mxu0 0.0
    %382 = vmatprep.subr.mxu0 0.0
    %383 = vmatpush1.msra.mxu0 0.0
    %384 = vmatprep.subr.mxu0 0.0
    %385 = vmatpush1.msra.mxu0 %v98
    %386 = vmatprep.subr.mxu0 0.0
    %387 = vmatpush1.msra.mxu0 %v97
    %388 = vmatprep.subr.mxu0 0.0
    %389 = vmatpush1.msra.mxu0 %v96
    %390 = vmatprep.subr.mxu0 0.0
    %391 = vmatpush1.msra.mxu0 %v95
    %392 = vmatprep.subr.mxu0 0.0
    %393 = vmatpush2.msra.mxu0 0.0
    %394 = vmatprep.subr.mxu0 0.0
    %395 = vmatpush2.msra.mxu0 0.0
    %396 = vmatprep.subr.mxu0 0.0
    %397 = vmatpush2.msra.mxu0 0.0
    %398 = vmatprep.subr.mxu0 0.0
    %399 = vmatpush2.msra.mxu0 0.0
    %400 = vmatprep.subr.mxu0 0.0
    %401 = vmatpush2.msra.mxu0 0.0
    %402 = vmatprep.subr.mxu0 0.0
    %403 = vmatpush2.msra.mxu0 0.0
    %404 = vmatprep.subr.mxu0 0.0
    %405 = vmatpush2.msra.mxu0 0.0
    %406 = vmatprep.subr.mxu0 0.0
    %407 = vmatpush2.msra.mxu0 0.0
    %408 = vmatprep.subr.mxu0 0.0
    %409 = vmatpush2.msra.mxu0 0.0
    %410 = vmatprep.subr.mxu0 0.0
    %411 = vmatpush2.msra.mxu0 0.0
    %412 = vmatprep.subr.mxu0 0.0
    %413 = vmatpush2.msra.mxu0 0.0
    %414 = vmatprep.subr.mxu0 0.0
    %415 = vmatpush2.msra.mxu0 0.0
    %416 = vmatprep.subr.mxu0 0.0
    %417 = vmatpush2.msra.mxu0 0.0
    %418 = vmatprep.subr.mxu0 0.0
    %419 = vmatpush2.msra.mxu0 0.0
    %420 = vmatprep.subr.mxu0 0.0
    %421 = vmatpush2.msra.mxu0 0.0
    %422 = vmatprep.subr.mxu0 0.0
    %423 = vmatpush2.msra.mxu0 0.0
    %424 = vmatprep.mubr.f32.mxu0 0.0
    %425 = vmatmul.mubr.f32.gmra.mxu0 %v355
    %v426 = vpop.f32.mrf.mxu0
    %v427 = vadd.f32 %v239, %v426
    %v428 = vpop.f32.mrf.mxu0
    %429 = vmatprep.mubr.f32.mxu0 0.0
    %430 = vmatmul.mubr.f32.gmra.mxu0 %v358
    %v431 = vpop.f32.mrf.mxu0
    %v432 = vadd.f32 %v239, %v431
    %v433 = vpop.f32.mrf.mxu0
    %434 = vdwg.mxu0
    %v435 = vsel %vm189, %v427, 0.0
    %436 = vadd.xlane.f32.xlu0 %v435
    %v437 = vpop.xlane.xlu0 %436
    %v438 = vsel %vm189, %v432, 0.0
    %439 = vadd.xlane.f32.xlu0 %v438
    %v440 = vpop.xlane.xlu0 %439
    %v441 = vmul.f32 %v437, %v196
    %v442 = vmul.f32 %v440, %v196
    %v443 = vsub.f32 %v427, %v441
    %v444 = vsub.f32 %v432, %v442
    %v445 = vmul.f32 %v443, %v443
    %v446 = vmul.f32 %v444, %v444
    %v447 = vsel %vm189, %v445, 0.0
    %448 = vadd.xlane.f32.xlu0 %v447
    %v449 = vpop.xlane.xlu0 %448
    %v450 = vsel %vm189, %v446, 0.0
    %451 = vadd.xlane.f32.xlu0 %v450
    %v452 = vpop.xlane.xlu0 %451
    %v453 = vmul.f32 %v449, %v196
    %v454 = vmul.f32 %v452, %v196
    %v455 = vadd.f32 %v453, 1e-05
    %v456 = vadd.f32 %v454, 1e-05
    %v457 = vrsqrt.pop %v455
    %v458 = vrsqrt.pop %v456
    %v459 = vmul.f32 %v443, %v457
    %v460 = vmul.f32 %v444, %v458
    %v461 = vmul.f32 %v459, %v221
    %v462 = vmul.f32 %v460, %v221
    %v463 = vadd.f32 %v461, %v229
    %v464 = vadd.f32 %v462, %v229
    %v465 = vmax.f32 %v463, 0.0
    %v466 = vmax.f32 %v464, 0.0
    %v467 = vld [vmem:[#allocation8] sm:$0xff]
    %v468 = vld [vmem:[#allocation8 + $0x8] sm:$0xff]
    %v469 = vld [vmem:[#allocation8 + $0x10] sm:$0xff]
    %v470 = vld [vmem:[#allocation8 + $0x18] sm:$0xff]
    %v472 = vlaneseq
    %v473 = vshrl.u32 %v472, 7
    %v474 = vsub.s32 0, %v473
    %v475 = vrot.slane %v92, %v474
    %v478 = vsel %vm189, %v465, 0
    %v481 = vsel %vm189, %v466, 0
    %483 = vmatprep.subr.mxu0 0.0
    %484 = vmatpush1.msra.mxu0 0.0
    %485 = vmatprep.subr.mxu0 0.0
    %486 = vmatpush1.msra.mxu0 0.0
    %487 = vmatprep.subr.mxu0 0.0
    %488 = vmatpush1.msra.mxu0 0.0
    %489 = vmatprep.subr.mxu0 0.0
    %490 = vmatpush1.msra.mxu0 0.0
    %491 = vmatprep.subr.mxu0 0.0
    %492 = vmatpush1.msra.mxu0 0.0
    %493 = vmatprep.subr.mxu0 0.0
    %494 = vmatpush1.msra.mxu0 0.0
    %495 = vmatprep.subr.mxu0 0.0
    %496 = vmatpush1.msra.mxu0 0.0
    %497 = vmatprep.subr.mxu0 0.0
    %498 = vmatpush1.msra.mxu0 0.0
    %499 = vmatprep.subr.mxu0 0.0
    %500 = vmatpush1.msra.mxu0 0.0
    %501 = vmatprep.subr.mxu0 0.0
    %502 = vmatpush1.msra.mxu0 0.0
    %503 = vmatprep.subr.mxu0 0.0
    %504 = vmatpush1.msra.mxu0 0.0
    %505 = vmatprep.subr.mxu0 0.0
    %506 = vmatpush1.msra.mxu0 0.0
    %507 = vmatprep.subr.mxu0 0.0
    %508 = vmatpush1.msra.mxu0 %v470
    %509 = vmatprep.subr.mxu0 0.0
    %510 = vmatpush1.msra.mxu0 %v469
    %511 = vmatprep.subr.mxu0 0.0
    %512 = vmatpush1.msra.mxu0 %v468
    %513 = vmatprep.subr.mxu0 0.0
    %514 = vmatpush1.msra.mxu0 %v467
    %515 = vmatprep.subr.mxu0 0.0
    %516 = vmatpush2.msra.mxu0 0.0
    %517 = vmatprep.subr.mxu0 0.0
    %518 = vmatpush2.msra.mxu0 0.0
    %519 = vmatprep.subr.mxu0 0.0
    %520 = vmatpush2.msra.mxu0 0.0
    %521 = vmatprep.subr.mxu0 0.0
    %522 = vmatpush2.msra.mxu0 0.0
    %523 = vmatprep.subr.mxu0 0.0
    %524 = vmatpush2.msra.mxu0 0.0
    %525 = vmatprep.subr.mxu0 0.0
    %526 = vmatpush2.msra.mxu0 0.0
    %527 = vmatprep.subr.mxu0 0.0
    %528 = vmatpush2.msra.mxu0 0.0
    %529 = vmatprep.subr.mxu0 0.0
    %530 = vmatpush2.msra.mxu0 0.0
    %531 = vmatprep.subr.mxu0 0.0
    %532 = vmatpush2.msra.mxu0 0.0
    %533 = vmatprep.subr.mxu0 0.0
    %534 = vmatpush2.msra.mxu0 0.0
    %535 = vmatprep.subr.mxu0 0.0
    %536 = vmatpush2.msra.mxu0 0.0
    %537 = vmatprep.subr.mxu0 0.0
    %538 = vmatpush2.msra.mxu0 0.0
    %539 = vmatprep.subr.mxu0 0.0
    %540 = vmatpush2.msra.mxu0 0.0
    %541 = vmatprep.subr.mxu0 0.0
    %542 = vmatpush2.msra.mxu0 0.0
    %543 = vmatprep.subr.mxu0 0.0
    %544 = vmatpush2.msra.mxu0 0.0
    %545 = vmatprep.subr.mxu0 0.0
    %546 = vmatpush2.msra.mxu0 0.0
    %547 = vmatprep.mubr.f32.mxu0 0.0
    %548 = vmatmul.mubr.f32.gmra.mxu0 %v478
    %v549 = vpop.f32.mrf.mxu0
    %v550 = vadd.f32 %v475, %v549
    %v551 = vpop.f32.mrf.mxu0
    %552 = vmatprep.mubr.f32.mxu0 0.0
    %553 = vmatmul.mubr.f32.gmra.mxu0 %v481
    %v554 = vpop.f32.mrf.mxu0
    %v555 = vadd.f32 %v475, %v554
    %v556 = vpop.f32.mrf.mxu0
    %557 = vdwg.mxu0
    %558 = vst [vmem:[#allocation10] sm:$0xff] %v550
    %559 = vst [vmem:[#allocation10 + $0x8] sm:$0xff] %v555
    // Predicated region
    $region54: #{tpu_custom_call.1} parent=1 // pred_check
      _
    $region55: #{tpu_custom_call.1} parent=1 // pred_check_branch
      %561 = sbr.rel (0) target = $region57
    $region56: #{tpu_custom_call.1} parent=1 // pred_region
      %s563 = ssub.s32 256, 256
      %564 = vsyncadd [#allocation4], %s563
      %s565 = sshll.u32 [#allocation10], 4
      %s566 = int_to_ptr.vmem [resolvable:$true] %s565
      %571 = dma.vmem_to_hbm [thread:$0]  %s566, 256, %s9, [#allocation4], 128, 128, 8
    $region57: #{tpu_custom_call.1} parent=1 // pred_fallthru
      _
    // Predicated region
    $region58: #{tpu_custom_call.1} parent=1 // pred_check
      _
    $region59: #{tpu_custom_call.1} parent=1 // pred_check_branch
      %573 = sbr.rel (0) target = $region61
    $region60: #{tpu_custom_call.1} parent=1 // pred_region
      %574 = dma.done [#allocation4], 256
    $region61: #{tpu_custom_call.1} parent=1 // pred_fallthru
      _
    %575 = vsyncpa [#allocation3], 1
    %576 = vsyncpa [#allocation6], 1
    %577 = vsyncpa [#allocation9], 1
    %578 = vsyncpa [#allocation4], 1

// kernel: tpu_custom_call.1
$region0: #{tpu_custom_call.1}
  #allocation0 [shape = 'u32[]', space=smem, size = 0x4, offset = 0x4, fixed_abs, tag = 'smem constant byte address 0x4 - core index']
  #allocation1 [shape = 'u32[144,128]{1,0:T(1,128)}', space=vmem, size = 0x12000, scoped, tag = 'internal scratch']
  %s0 = inlined_call_operand.hbm [shape: f32[16,16], index: 0, kind: input, shape index: {}]
  %s1 = inlined_call_operand.hbm [shape: f32[16,32], index: 1, kind: input, shape index: {}]
  %s2 = inlined_call_operand.vmem [shape: f32[1,32], index: 2, kind: input, shape index: {}]
  %s3 = inlined_call_operand.hbm [shape: f32[32,32], index: 3, kind: input, shape index: {}]
  %s4 = inlined_call_operand.vmem [shape: f32[1,32], index: 4, kind: input, shape index: {}]
  %s5 = inlined_call_operand.hbm [shape: f32[32,128], index: 5, kind: input, shape index: {}]
  %s6 = inlined_call_operand.vmem [shape: f32[1,128], index: 6, kind: input, shape index: {}]
  %s7 = inlined_call_operand.vmem [shape: f32[1,32], index: 7, kind: input, shape index: {}]
  %s8 = inlined_call_operand.vmem [shape: f32[1,32], index: 8, kind: input, shape index: {}]
  %s9 = inlined_call_operand.hbm [shape: f32[16,128], index: 9, kind: output, shape index: {}]
  %s10 = sld [smem:[#allocation0]]
  $region62: #{tpu_custom_call.1} parent=0
    _
  %s12 = ssub.s32 1, %s10
  %s13 = scalar_select 0, %s12, %s10
  $region1: #{tpu_custom_call.1} parent=0
    #allocation2 [shape = 'u8[8192]{0}', space=vmem, size = 0x2000, scoped, tag = 'input window, operand 0, single buffered']
    #allocation3 [shape = 's32[1]{0}', space=sflag, size = 0x4, scoped, tag = 'scoped memory for tpu_custom_call.1']
    #allocation4 [shape = 's32[1]{0}', space=sflag, size = 0x4, scoped, tag = 'scoped memory for tpu_custom_call.1']
    #allocation5 [shape = 'u8[8192]{0}', space=vmem, size = 0x2000, scoped, tag = 'input window, operand 1, single buffered']
    #allocation6 [shape = 's32[1]{0}', space=sflag, size = 0x4, scoped, tag = 'scoped memory for tpu_custom_call.1']
    #allocation7 [shape = 'u8[16384]{0}', space=vmem, size = 0x4000, scoped, tag = 'input window, operand 3, single buffered']
    #allocation8 [shape = 'u8[16384]{0}', space=vmem, size = 0x4000, scoped, tag = 'input window, operand 5, single buffered']
    #allocation9 [shape = 's32[1]{0}', space=sflag, size = 0x4, scoped, tag = 'scoped memory for tpu_custom_call.1']
    #allocation10 [shape = 'u8[8192]{0}', space=vmem, size = 0x2000, scoped, tag = 'output window, operand 0, single buffered']
    %14 = vsyncpa [#allocation3], 0
    %15 = vsyncpa [#allocation6], 0
    %16 = vsyncpa [#allocation9], 0
    %17 = vsyncpa [#allocation4], 0
    // Predicated region
    $region2: #{tpu_custom_call.1} parent=1 // pred_check
      _
    $region3: #{tpu_custom_call.1} parent=1 // pred_check_branch
      %19 = sbr.rel (0) target = $region5
    $region4: #{tpu_custom_call.1} parent=1 // pred_region
      %s21 = ssub.s32 256, 256
      %22 = vsyncadd [#allocation3], %s21
      %s23 = sshll.u32 [#allocation2], 4
      %s24 = int_to_ptr.vmem [resolvable:$true] %s23
      %29 = dma.hbm_to_vmem [thread:$0]  %s0, 256, %s24, [#allocation3], 128, 128, 8
    $region5: #{tpu_custom_call.1} parent=1 // pred_fallthru
      _
    // Predicated region
    $region6: #{tpu_custom_call.1} parent=1 // pred_check
      _
    $region7: #{tpu_custom_call.1} parent=1 // pred_check_branch
      %31 = sbr.rel (0) target = $region9
    $region8: #{tpu_custom_call.1} parent=1 // pred_region
      %s33 = ssub.s32 256, 256
      %34 = vsyncadd [#allocation6], %s33
      %s35 = sshll.u32 [#allocation5], 4
      %s36 = int_to_ptr.vmem [resolvable:$true] %s35
      %41 = dma.hbm_to_vmem [thread:$0]  %s1, 256, %s36, [#allocation6], 128, 128, 8
    $region9: #{tpu_custom_call.1} parent=1 // pred_fallthru
      _
    // Predicated region
    $region10: #{tpu_custom_call.1} parent=1 // pred_check
      _
    $region11: #{tpu_custom_call.1} parent=1 // pred_check_branch
      %43 = sbr.rel (0) target = $region13
    $region12: #{tpu_custom_call.1} parent=1 // pred_region
      _
    $region13: #{tpu_custom_call.1} parent=1 // pred_fallthru
      _
    // Predicated region
    $region14: #{tpu_custom_call.1} parent=1 // pred_check
      _
    $region15: #{tpu_custom_call.1} parent=1 // pred_check_branch
      %45 = sbr.rel (0) target = $region17
    $region16: #{tpu_custom_call.1} parent=1 // pred_region
      %s47 = ssub.s32 512, 512
      %48 = vsyncadd [#allocation6], %s47
      %s49 = sshll.u32 [#allocation7], 4
      %s50 = int_to_ptr.vmem [resolvable:$true] %s49
      %55 = dma.hbm_to_vmem [thread:$0]  %s3, 512, %s50, [#allocation6], 128, 128, 8
    $region17: #{tpu_custom_call.1} parent=1 // pred_fallthru
      _
    // Predicated region
    $region18: #{tpu_custom_call.1} parent=1 // pred_check
      _
    $region19: #{tpu_custom_call.1} parent=1 // pred_check_branch
      %57 = sbr.rel (0) target = $region21
    $region20: #{tpu_custom_call.1} parent=1 // pred_region
      _
    $region21: #{tpu_custom_call.1} parent=1 // pred_fallthru
      _
    // Predicated region
    $region22: #{tpu_custom_call.1} parent=1 // pred_check
      _
    $region23: #{tpu_custom_call.1} parent=1 // pred_check_branch
      %59 = sbr.rel (0) target = $region25
    $region24: #{tpu_custom_call.1} parent=1 // pred_region
      %s61 = ssub.s32 512, 512
      %62 = vsyncadd [#allocation9], %s61
      %s63 = sshll.u32 [#allocation8], 4
      %s64 = int_to_ptr.vmem [resolvable:$true] %s63
      %69 = dma.hbm_to_vmem [thread:$0]  %s5, 512, %s64, [#allocation9], 128, 128, 8
    $region25: #{tpu_custom_call.1} parent=1 // pred_fallthru
      _
    // Predicated region
    $region26: #{tpu_custom_call.1} parent=1 // pred_check
      _
    $region27: #{tpu_custom_call.1} parent=1 // pred_check_branch
      %71 = sbr.rel (0) target = $region29
    $region28: #{tpu_custom_call.1} parent=1 // pred_region
      _
    $region29: #{tpu_custom_call.1} parent=1 // pred_fallthru
      _
    // Predicated region
    $region30: #{tpu_custom_call.1} parent=1 // pred_check
      _
    $region31: #{tpu_custom_call.1} parent=1 // pred_check_branch
      %73 = sbr.rel (0) target = $region33
    $region32: #{tpu_custom_call.1} parent=1 // pred_region
      _
    $region33: #{tpu_custom_call.1} parent=1 // pred_fallthru
      _
    // Predicated region
    $region34: #{tpu_custom_call.1} parent=1 // pred_check
      _
    $region35: #{tpu_custom_call.1} parent=1 // pred_check_branch
      %75 = sbr.rel (0) target = $region37
    $region36: #{tpu_custom_call.1} parent=1 // pred_region
      _
    $region37: #{tpu_custom_call.1} parent=1 // pred_fallthru
      _
    // Predicated region
    $region38: #{tpu_custom_call.1} parent=1 // pred_check
      _
    $region39: #{tpu_custom_call.1} parent=1 // pred_check_branch
      %77 = sbr.rel (0) target = $region41
    $region40: #{tpu_custom_call.1} parent=1 // pred_region
      %78 = dma.done [#allocation3], 256
    $region41: #{tpu_custom_call.1} parent=1 // pred_fallthru
      _
    // Predicated region
    $region42: #{tpu_custom_call.1} parent=1 // pred_check
      _
    $region43: #{tpu_custom_call.1} parent=1 // pred_check_branch
      %80 = sbr.rel (0) target = $region45
    $region44: #{tpu_custom_call.1} parent=1 // pred_region
      %81 = dma.done [#allocation6], 256
    $region45: #{tpu_custom_call.1} parent=1 // pred_fallthru
      _
    // Predicated region
    $region46: #{tpu_custom_call.1} parent=1 // pred_check
      _
    $region47: #{tpu_custom_call.1} parent=1 // pred_check_branch
      %83 = sbr.rel (0) target = $region49
    $region48: #{tpu_custom_call.1} parent=1 // pred_region
      %84 = dma.done [#allocation6], 512
    $region49: #{tpu_custom_call.1} parent=1 // pred_fallthru
      _
    // Predicated region
    $region50: #{tpu_custom_call.1} parent=1 // pred_check
      _
    $region51: #{tpu_custom_call.1} parent=1 // pred_check_branch
      %86 = sbr.rel (0) target = $region53
    $region52: #{tpu_custom_call.1} parent=1 // pred_region
      %87 = dma.done [#allocation9], 512
    $region53: #{tpu_custom_call.1} parent=1 // pred_fallthru
      _
    %v88 = vld [vmem:[%s7] sm:$0x1]
    %v89 = vld [vmem:[%s8] sm:$0x1]
    %v90 = vld [vmem:[%s2] sm:$0x1]
    %v91 = vld [vmem:[%s4] sm:$0x1]
    %v92 = vld [vmem:[%s6] sm:$0x1]
    %v93 = vld [vmem:[#allocation2] sm:$0xff]
    %v94 = vld [vmem:[#allocation2 + $0x8] sm:$0xff]
    %v95 = vld [vmem:[#allocation7] sm:$0xff]
    %v96 = vld [vmem:[#allocation7 + $0x8] sm:$0xff]
    %v97 = vld [vmem:[#allocation7 + $0x10] sm:$0xff]
    %v98 = vld [vmem:[#allocation7 + $0x18] sm:$0xff]
    %v99 = vld [vmem:[#allocation5] sm:$0xff]
    %v100 = vld [vmem:[#allocation5 + $0x8] sm:$0xff]
    %v102 = vlaneseq
    %v103 = vshrl.u32 %v102, 7
    %v104 = vsub.s32 0, %v103
    %v105 = vrot.slane %v90, %v104
    %vm107 = vcmask 130048
    %v109 = vsel %vm107, %v93, 0
    %v112 = vsel %vm107, %v94, 0
    %114 = vmatprep.subr.mxu0 0.0
    %115 = vmatpush1.msra.mxu0 0.0
    %116 = vmatprep.subr.mxu0 0.0
    %117 = vmatpush1.msra.mxu0 0.0
    %118 = vmatprep.subr.mxu0 0.0
    %119 = vmatpush1.msra.mxu0 0.0
    %120 = vmatprep.subr.mxu0 0.0
    %121 = vmatpush1.msra.mxu0 0.0
    %122 = vmatprep.subr.mxu0 0.0
    %123 = vmatpush1.msra.mxu0 0.0
    %124 = vmatprep.subr.mxu0 0.0
    %125 = vmatpush1.msra.mxu0 0.0
    %126 = vmatprep.subr.mxu0 0.0
    %127 = vmatpush1.msra.mxu0 0.0
    %128 = vmatprep.subr.mxu0 0.0
    %129 = vmatpush1.msra.mxu0 0.0
    %130 = vmatprep.subr.mxu0 0.0
    %131 = vmatpush1.msra.mxu0 0.0
    %132 = vmatprep.subr.mxu0 0.0
    %133 = vmatpush1.msra.mxu0 0.0
    %134 = vmatprep.subr.mxu0 0.0
    %135 = vmatpush1.msra.mxu0 0.0
    %136 = vmatprep.subr.mxu0 0.0
    %137 = vmatpush1.msra.mxu0 0.0
    %138 = vmatprep.subr.mxu0 0.0
    %139 = vmatpush1.msra.mxu0 0.0
    %140 = vmatprep.subr.mxu0 0.0
    %141 = vmatpush1.msra.mxu0 0.0
    %142 = vmatprep.subr.mxu0 0.0
    %143 = vmatpush1.msra.mxu0 %v100
    %144 = vmatprep.subr.mxu0 0.0
    %145 = vmatpush1.msra.mxu0 %v99
    %146 = vmatprep.subr.mxu0 0.0
    %147 = vmatpush2.msra.mxu0 0.0
    %148 = vmatprep.subr.mxu0 0.0
    %149 = vmatpush2.msra.mxu0 0.0
    %150 = vmatprep.subr.mxu0 0.0
    %151 = vmatpush2.msra.mxu0 0.0
    %152 = vmatprep.subr.mxu0 0.0
    %153 = vmatpush2.msra.mxu0 0.0
    %154 = vmatprep.subr.mxu0 0.0
    %155 = vmatpush2.msra.mxu0 0.0
    %156 = vmatprep.subr.mxu0 0.0
    %157 = vmatpush2.msra.mxu0 0.0
    %158 = vmatprep.subr.mxu0 0.0
    %159 = vmatpush2.msra.mxu0 0.0
    %160 = vmatprep.subr.mxu0 0.0
    %161 = vmatpush2.msra.mxu0 0.0
    %162 = vmatprep.subr.mxu0 0.0
    %163 = vmatpush2.msra.mxu0 0.0
    %164 = vmatprep.subr.mxu0 0.0
    %165 = vmatpush2.msra.mxu0 0.0
    %166 = vmatprep.subr.mxu0 0.0
    %167 = vmatpush2.msra.mxu0 0.0
    %168 = vmatprep.subr.mxu0 0.0
    %169 = vmatpush2.msra.mxu0 0.0
    %170 = vmatprep.subr.mxu0 0.0
    %171 = vmatpush2.msra.mxu0 0.0
    %172 = vmatprep.subr.mxu0 0.0
    %173 = vmatpush2.msra.mxu0 0.0
    %174 = vmatprep.subr.mxu0 0.0
    %175 = vmatpush2.msra.mxu0 0.0
    %176 = vmatprep.subr.mxu0 0.0
    %177 = vmatpush2.msra.mxu0 0.0
    %178 = vmatprep.mubr.f32.mxu0 0.0
    %179 = vmatmul.mubr.f32.gmra.mxu0 %v109
    %v180 = vpop.f32.mrf.mxu0
    %v181 = vadd.f32 %v105, %v180
    %v182 = vpop.f32.mrf.mxu0
    %183 = vmatprep.mubr.f32.mxu0 0.0
    %184 = vmatmul.mubr.f32.gmra.mxu0 %v112
    %v185 = vpop.f32.mrf.mxu0
    %v186 = vadd.f32 %v105, %v185
    %v187 = vpop.f32.mrf.mxu0
    %188 = vdwg.mxu0
    %vm189 = vcmask 261120
    %v190 = vsel %vm189, %v181, 0.0
    %191 = vadd.xlane.f32.xlu0 %v190
    %v192 = vpop.xlane.xlu0 %191
    %v193 = vsel %vm189, %v186, 0.0
    %194 = vadd.xlane.f32.xlu0 %v193
    %v195 = vpop.xlane.xlu0 %194
    %v196 = vrcp.pop 32.0
    %v197 = vmul.f32 %v192, %v196
    %v198 = vmul.f32 %v195, %v196
    %v199 = vsub.f32 %v181, %v197
    %v200 = vsub.f32 %v186, %v198
    %v201 = vmul.f32 %v199, %v199
    %v202 = vmul.f32 %v200, %v200
    %v203 = vsel %vm189, %v201, 0.0
    %204 = vadd.xlane.f32.xlu0 %v203
    %v205 = vpop.xlane.xlu0 %204
    %v206 = vsel %vm189, %v202, 0.0
    %207 = vadd.xlane.f32.xlu0 %v206
    %v208 = vpop.xlane.xlu0 %207
    %v209 = vmul.f32 %v205, %v196
    %v210 = vmul.f32 %v208, %v196
    %v211 = vadd.f32 %v209, 1e-05
    %v212 = vadd.f32 %v210, 1e-05
    %v213 = vrsqrt.pop %v211
    %v214 = vrsqrt.pop %v212
    %v215 = vmul.f32 %v199, %v213
    %v216 = vmul.f32 %v200, %v214
    %v218 = vlaneseq
    %v219 = vshrl.u32 %v218, 7
    %v220 = vsub.s32 0, %v219
    %v221 = vrot.slane %v88, %v220
    %v223 = vmul.f32 %v215, %v221
    %v224 = vmul.f32 %v216, %v221
    %v226 = vlaneseq
    %v227 = vshrl.u32 %v226, 7
    %v228 = vsub.s32 0, %v227
    %v229 = vrot.slane %v89, %v228
    %v231 = vadd.f32 %v223, %v229
    %v232 = vadd.f32 %v224, %v229
    %v233 = vmax.f32 %v231, 0.0
    %v234 = vmax.f32 %v232, 0.0
    %v236 = vlaneseq
    %v237 = vshrl.u32 %v236, 7
    %v238 = vsub.s32 0, %v237
    %v239 = vrot.slane %v91, %v238
    %v242 = vsel %vm189, %v233, 0
    %v245 = vsel %vm189, %v234, 0
    %247 = vmatprep.subr.mxu0 0.0
    %248 = vmatpush1.msra.mxu0 0.0
    %249 = vmatprep.subr.mxu0 0.0
    %250 = vmatpush1.msra.mxu0 0.0
    %251 = vmatprep.subr.mxu0 0.0
    %252 = vmatpush1.msra.mxu0 0.0
    %253 = vmatprep.subr.mxu0 0.0
    %254 = vmatpush1.msra.mxu0 0.0
    %255 = vmatprep.subr.mxu0 0.0
    %256 = vmatpush1.msra.mxu0 0.0
    %257 = vmatprep.subr.mxu0 0.0
    %258 = vmatpush1.msra.mxu0 0.0
    %259 = vmatprep.subr.mxu0 0.0
    %260 = vmatpush1.msra.mxu0 0.0
    %261 = vmatprep.subr.mxu0 0.0
    %262 = vmatpush1.msra.mxu0 0.0
    %263 = vmatprep.subr.mxu0 0.0
    %264 = vmatpush1.msra.mxu0 0.0
    %265 = vmatprep.subr.mxu0 0.0
    %266 = vmatpush1.msra.mxu0 0.0
    %267 = vmatprep.subr.mxu0 0.0
    %268 = vmatpush1.msra.mxu0 0.0
    %269 = vmatprep.subr.mxu0 0.0
    %270 = vmatpush1.msra.mxu0 0.0
    %271 = vmatprep.subr.mxu0 0.0
    %272 = vmatpush1.msra.mxu0 %v98
    %273 = vmatprep.subr.mxu0 0.0
    %274 = vmatpush1.msra.mxu0 %v97
    %275 = vmatprep.subr.mxu0 0.0
    %276 = vmatpush1.msra.mxu0 %v96
    %277 = vmatprep.subr.mxu0 0.0
    %278 = vmatpush1.msra.mxu0 %v95
    %279 = vmatprep.subr.mxu0 0.0
    %280 = vmatpush2.msra.mxu0 0.0
    %281 = vmatprep.subr.mxu0 0.0
    %282 = vmatpush2.msra.mxu0 0.0
    %283 = vmatprep.subr.mxu0 0.0
    %284 = vmatpush2.msra.mxu0 0.0
    %285 = vmatprep.subr.mxu0 0.0
    %286 = vmatpush2.msra.mxu0 0.0
    %287 = vmatprep.subr.mxu0 0.0
    %288 = vmatpush2.msra.mxu0 0.0
    %289 = vmatprep.subr.mxu0 0.0
    %290 = vmatpush2.msra.mxu0 0.0
    %291 = vmatprep.subr.mxu0 0.0
    %292 = vmatpush2.msra.mxu0 0.0
    %293 = vmatprep.subr.mxu0 0.0
    %294 = vmatpush2.msra.mxu0 0.0
    %295 = vmatprep.subr.mxu0 0.0
    %296 = vmatpush2.msra.mxu0 0.0
    %297 = vmatprep.subr.mxu0 0.0
    %298 = vmatpush2.msra.mxu0 0.0
    %299 = vmatprep.subr.mxu0 0.0
    %300 = vmatpush2.msra.mxu0 0.0
    %301 = vmatprep.subr.mxu0 0.0
    %302 = vmatpush2.msra.mxu0 0.0
    %303 = vmatprep.subr.mxu0 0.0
    %304 = vmatpush2.msra.mxu0 0.0
    %305 = vmatprep.subr.mxu0 0.0
    %306 = vmatpush2.msra.mxu0 0.0
    %307 = vmatprep.subr.mxu0 0.0
    %308 = vmatpush2.msra.mxu0 0.0
    %309 = vmatprep.subr.mxu0 0.0
    %310 = vmatpush2.msra.mxu0 0.0
    %311 = vmatprep.mubr.f32.mxu0 0.0
    %312 = vmatmul.mubr.f32.gmra.mxu0 %v242
    %v313 = vpop.f32.mrf.mxu0
    %v314 = vadd.f32 %v239, %v313
    %v315 = vpop.f32.mrf.mxu0
    %316 = vmatprep.mubr.f32.mxu0 0.0
    %317 = vmatmul.mubr.f32.gmra.mxu0 %v245
    %v318 = vpop.f32.mrf.mxu0
    %v319 = vadd.f32 %v239, %v318
    %v320 = vpop.f32.mrf.mxu0
    %321 = vdwg.mxu0
    %v322 = vsel %vm189, %v314, 0.0
    %323 = vadd.xlane.f32.xlu0 %v322
    %v324 = vpop.xlane.xlu0 %323
    %v325 = vsel %vm189, %v319, 0.0
    %326 = vadd.xlane.f32.xlu0 %v325
    %v327 = vpop.xlane.xlu0 %326
    %v328 = vmul.f32 %v324, %v196
    %v329 = vmul.f32 %v327, %v196
    %v330 = vsub.f32 %v314, %v328
    %v331 = vsub.f32 %v319, %v329
    %v332 = vmul.f32 %v330, %v330
    %v333 = vmul.f32 %v331, %v331
    %v334 = vsel %vm189, %v332, 0.0
    %335 = vadd.xlane.f32.xlu0 %v334
    %v336 = vpop.xlane.xlu0 %335
    %v337 = vsel %vm189, %v333, 0.0
    %338 = vadd.xlane.f32.xlu0 %v337
    %v339 = vpop.xlane.xlu0 %338
    %v340 = vmul.f32 %v336, %v196
    %v341 = vmul.f32 %v339, %v196
    %v342 = vadd.f32 %v340, 1e-05
    %v343 = vadd.f32 %v341, 1e-05
    %v344 = vrsqrt.pop %v342
    %v345 = vrsqrt.pop %v343
    %v346 = vmul.f32 %v330, %v344
    %v347 = vmul.f32 %v331, %v345
    %v348 = vmul.f32 %v346, %v221
    %v349 = vmul.f32 %v347, %v221
    %v350 = vadd.f32 %v348, %v229
    %v351 = vadd.f32 %v349, %v229
    %v352 = vmax.f32 %v350, 0.0
    %v353 = vmax.f32 %v351, 0.0
    %v355 = vsel %vm189, %v352, 0
    %v358 = vsel %vm189, %v353, 0
    %360 = vmatprep.subr.mxu0 0.0
    %361 = vmatpush1.msra.mxu0 0.0
    %362 = vmatprep.subr.mxu0 0.0
    %363 = vmatpush1.msra.mxu0 0.0
    %364 = vmatprep.subr.mxu0 0.0
    %365 = vmatpush1.msra.mxu0 0.0
    %366 = vmatprep.subr.mxu0 0.0
    %367 = vmatpush1.msra.mxu0 0.0
    %368 = vmatprep.subr.mxu0 0.0
    %369 = vmatpush1.msra.mxu0 0.0
    %370 = vmatprep.subr.mxu0 0.0
    %371 = vmatpush1.msra.mxu0 0.0
    %372 = vmatprep.subr.mxu0 0.0
    %373 = vmatpush1.msra.mxu0 0.0
    %374 = vmatprep.subr.mxu0 0.0
    %375 = vmatpush1.msra.mxu0 0.0
    %376 = vmatprep.subr.mxu0 0.0
    %377 = vmatpush1.msra.mxu0 0.0
    %378 = vmatprep.subr.mxu0 0.0
    %379 = vmatpush1.msra.mxu0 0.0
    %380 = vmatprep.subr.mxu0 0.0
    %381 = vmatpush1.msra.mxu0 0.0
    %382 = vmatprep.subr.mxu0 0.0
    %383 = vmatpush1.msra.mxu0 0.0
    %384 = vmatprep.subr.mxu0 0.0
    %385 = vmatpush1.msra.mxu0 %v98
    %386 = vmatprep.subr.mxu0 0.0
    %387 = vmatpush1.msra.mxu0 %v97
    %388 = vmatprep.subr.mxu0 0.0
    %389 = vmatpush1.msra.mxu0 %v96
    %390 = vmatprep.subr.mxu0 0.0
    %391 = vmatpush1.msra.mxu0 %v95
    %392 = vmatprep.subr.mxu0 0.0
    %393 = vmatpush2.msra.mxu0 0.0
    %394 = vmatprep.subr.mxu0 0.0
    %395 = vmatpush2.msra.mxu0 0.0
    %396 = vmatprep.subr.mxu0 0.0
    %397 = vmatpush2.msra.mxu0 0.0
    %398 = vmatprep.subr.mxu0 0.0
    %399 = vmatpush2.msra.mxu0 0.0
    %400 = vmatprep.subr.mxu0 0.0
    %401 = vmatpush2.msra.mxu0 0.0
    %402 = vmatprep.subr.mxu0 0.0
    %403 = vmatpush2.msra.mxu0 0.0
    %404 = vmatprep.subr.mxu0 0.0
    %405 = vmatpush2.msra.mxu0 0.0
    %406 = vmatprep.subr.mxu0 0.0
    %407 = vmatpush2.msra.mxu0 0.0
    %408 = vmatprep.subr.mxu0 0.0
    %409 = vmatpush2.msra.mxu0 0.0
    %410 = vmatprep.subr.mxu0 0.0
    %411 = vmatpush2.msra.mxu0 0.0
    %412 = vmatprep.subr.mxu0 0.0
    %413 = vmatpush2.msra.mxu0 0.0
    %414 = vmatprep.subr.mxu0 0.0
    %415 = vmatpush2.msra.mxu0 0.0
    %416 = vmatprep.subr.mxu0 0.0
    %417 = vmatpush2.msra.mxu0 0.0
    %418 = vmatprep.subr.mxu0 0.0
    %419 = vmatpush2.msra.mxu0 0.0
    %420 = vmatprep.subr.mxu0 0.0
    %421 = vmatpush2.msra.mxu0 0.0
    %422 = vmatprep.subr.mxu0 0.0
    %423 = vmatpush2.msra.mxu0 0.0
    %424 = vmatprep.mubr.f32.mxu0 0.0
    %425 = vmatmul.mubr.f32.gmra.mxu0 %v355
    %v426 = vpop.f32.mrf.mxu0
    %v427 = vadd.f32 %v239, %v426
    %v428 = vpop.f32.mrf.mxu0
    %429 = vmatprep.mubr.f32.mxu0 0.0
    %430 = vmatmul.mubr.f32.gmra.mxu0 %v358
    %v431 = vpop.f32.mrf.mxu0
    %v432 = vadd.f32 %v239, %v431
    %v433 = vpop.f32.mrf.mxu0
    %434 = vdwg.mxu0
    %v435 = vsel %vm189, %v427, 0.0
    %436 = vadd.xlane.f32.xlu0 %v435
    %v437 = vpop.xlane.xlu0 %436
    %v438 = vsel %vm189, %v432, 0.0
    %439 = vadd.xlane.f32.xlu0 %v438
    %v440 = vpop.xlane.xlu0 %439
    %v441 = vmul.f32 %v437, %v196
    %v442 = vmul.f32 %v440, %v196
    %v443 = vsub.f32 %v427, %v441
    %v444 = vsub.f32 %v432, %v442
    %v445 = vmul.f32 %v443, %v443
    %v446 = vmul.f32 %v444, %v444
    %v447 = vsel %vm189, %v445, 0.0
    %448 = vadd.xlane.f32.xlu0 %v447
    %v449 = vpop.xlane.xlu0 %448
    %v450 = vsel %vm189, %v446, 0.0
    %451 = vadd.xlane.f32.xlu0 %v450
    %v452 = vpop.xlane.xlu0 %451
    %v453 = vmul.f32 %v449, %v196
    %v454 = vmul.f32 %v452, %v196
    %v455 = vadd.f32 %v453, 1e-05
    %v456 = vadd.f32 %v454, 1e-05
    %v457 = vrsqrt.pop %v455
    %v458 = vrsqrt.pop %v456
    %v459 = vmul.f32 %v443, %v457
    %v460 = vmul.f32 %v444, %v458
    %v461 = vmul.f32 %v459, %v221
    %v462 = vmul.f32 %v460, %v221
    %v463 = vadd.f32 %v461, %v229
    %v464 = vadd.f32 %v462, %v229
    %v465 = vmax.f32 %v463, 0.0
    %v466 = vmax.f32 %v464, 0.0
    %v467 = vld [vmem:[#allocation8] sm:$0xff]
    %v468 = vld [vmem:[#allocation8 + $0x8] sm:$0xff]
    %v469 = vld [vmem:[#allocation8 + $0x10] sm:$0xff]
    %v470 = vld [vmem:[#allocation8 + $0x18] sm:$0xff]
    %v472 = vlaneseq
    %v473 = vshrl.u32 %v472, 7
    %v474 = vsub.s32 0, %v473
    %v475 = vrot.slane %v92, %v474
    %v478 = vsel %vm189, %v465, 0
    %v481 = vsel %vm189, %v466, 0
    %483 = vmatprep.subr.mxu0 0.0
    %484 = vmatpush1.msra.mxu0 0.0
    %485 = vmatprep.subr.mxu0 0.0
    %486 = vmatpush1.msra.mxu0 0.0
    %487 = vmatprep.subr.mxu0 0.0
    %488 = vmatpush1.msra.mxu0 0.0
    %489 = vmatprep.subr.mxu0 0.0
    %490 = vmatpush1.msra.mxu0 0.0
    %491 = vmatprep.subr.mxu0 0.0
    %492 = vmatpush1.msra.mxu0 0.0
    %493 = vmatprep.subr.mxu0 0.0
    %494 = vmatpush1.msra.mxu0 0.0
    %495 = vmatprep.subr.mxu0 0.0
    %496 = vmatpush1.msra.mxu0 0.0
    %497 = vmatprep.subr.mxu0 0.0
    %498 = vmatpush1.msra.mxu0 0.0
    %499 = vmatprep.subr.mxu0 0.0
    %500 = vmatpush1.msra.mxu0 0.0
    %501 = vmatprep.subr.mxu0 0.0
    %502 = vmatpush1.msra.mxu0 0.0
    %503 = vmatprep.subr.mxu0 0.0
    %504 = vmatpush1.msra.mxu0 0.0
    %505 = vmatprep.subr.mxu0 0.0
    %506 = vmatpush1.msra.mxu0 0.0
    %507 = vmatprep.subr.mxu0 0.0
    %508 = vmatpush1.msra.mxu0 %v470
    %509 = vmatprep.subr.mxu0 0.0
    %510 = vmatpush1.msra.mxu0 %v469
    %511 = vmatprep.subr.mxu0 0.0
    %512 = vmatpush1.msra.mxu0 %v468
    %513 = vmatprep.subr.mxu0 0.0
    %514 = vmatpush1.msra.mxu0 %v467
    %515 = vmatprep.subr.mxu0 0.0
    %516 = vmatpush2.msra.mxu0 0.0
    %517 = vmatprep.subr.mxu0 0.0
    %518 = vmatpush2.msra.mxu0 0.0
    %519 = vmatprep.subr.mxu0 0.0
    %520 = vmatpush2.msra.mxu0 0.0
    %521 = vmatprep.subr.mxu0 0.0
    %522 = vmatpush2.msra.mxu0 0.0
    %523 = vmatprep.subr.mxu0 0.0
    %524 = vmatpush2.msra.mxu0 0.0
    %525 = vmatprep.subr.mxu0 0.0
    %526 = vmatpush2.msra.mxu0 0.0
    %527 = vmatprep.subr.mxu0 0.0
    %528 = vmatpush2.msra.mxu0 0.0
    %529 = vmatprep.subr.mxu0 0.0
    %530 = vmatpush2.msra.mxu0 0.0
    %531 = vmatprep.subr.mxu0 0.0
    %532 = vmatpush2.msra.mxu0 0.0
    %533 = vmatprep.subr.mxu0 0.0
    %534 = vmatpush2.msra.mxu0 0.0
    %535 = vmatprep.subr.mxu0 0.0
    %536 = vmatpush2.msra.mxu0 0.0
    %537 = vmatprep.subr.mxu0 0.0
    %538 = vmatpush2.msra.mxu0 0.0
    %539 = vmatprep.subr.mxu0 0.0
    %540 = vmatpush2.msra.mxu0 0.0
    %541 = vmatprep.subr.mxu0 0.0
    %542 = vmatpush2.msra.mxu0 0.0
    %543 = vmatprep.subr.mxu0 0.0
    %544 = vmatpush2.msra.mxu0 0.0
    %545 = vmatprep.subr.mxu0 0.0
    %546 = vmatpush2.msra.mxu0 0.0
    %547 = vmatprep.mubr.f32.mxu0 0.0
    %548 = vmatmul.mubr.f32.gmra.mxu0 %v478
    %v549 = vpop.f32.mrf.mxu0
    %v550 = vadd.f32 %v475, %v549
    %v551 = vpop.f32.mrf.mxu0
    %552 = vmatprep.mubr.f32.mxu0 0.0
    %553 = vmatmul.mubr.f32.gmra.mxu0 %v481
    %v554 = vpop.f32.mrf.mxu0
    %v555 = vadd.f32 %v475, %v554
    %v556 = vpop.f32.mrf.mxu0
    %557 = vdwg.mxu0
    %558 = vst [vmem:[#allocation10] sm:$0xff] %v550
    %559 = vst [vmem:[#allocation10 + $0x8] sm:$0xff] %v555
    // Predicated region
    $region54: #{tpu_custom_call.1} parent=1 // pred_check
      _
    $region55: #{tpu_custom_call.1} parent=1 // pred_check_branch
      %561 = sbr.rel (0) target = $region57
    $region56: #{tpu_custom_call.1} parent=1 // pred_region
      %s563 = ssub.s32 256, 256
      %564 = vsyncadd [#allocation4], %s563
      %s565 = sshll.u32 [#allocation10], 4
      %s566 = int_to_ptr.vmem [resolvable:$true] %s565
      %571 = dma.vmem_to_hbm [thread:$0]  %s566, 256, %s9, [#allocation4], 128, 128, 8
    $region57: #{tpu_custom_call.1} parent=1 // pred_fallthru
      _
    // Predicated region
    $region58: #{tpu_custom_call.1} parent=1 // pred_check
      _
    $region59: #{tpu_custom_call.1} parent=1 // pred_check_branch
      %573 = sbr.rel (0) target = $region61
    $region60: #{tpu_custom_call.1} parent=1 // pred_region
      %574 = dma.done [#allocation4], 256
    $region61: #{tpu_custom_call.1} parent=1 // pred_fallthru
      _
    %575 = vsyncpa [#allocation3], 1
    %576 = vsyncpa [#allocation6], 1
    %577 = vsyncpa [#allocation9], 1
    %578 = vsyncpa [#allocation4], 1

</llo_original>
